<compile_context>
chip_gen: v5e
topology: v5e:2x2
jax: 0.10.0
libtpu: 0.0.40
codegen_flags: <defaults>
</compile_context>

<pallas_src>
import functools

import jax
import jax.numpy as jnp
import numpy as np
from jax import lax
from jax.experimental import pallas as pl
from jax.experimental.pallas import tpu as pltpu

VMEM = pltpu.MemorySpace.VMEM
F32 = jnp.float32


def _whole(n):
    """Whole-array-in-VMEM BlockSpecs (grid-less call)."""
    return [pl.BlockSpec(memory_space=VMEM)] * n


# ---------------------------------------------------------------------------
# Fully fused kernel: view-1 AE + view-2 AE + fusion + soft assignment.
# ---------------------------------------------------------------------------
def _momvfcc_kernel(a1_ref, x1_ref, w11_ref, w12_ref,
                    a2_ref, x2_ref, w21_ref, w22_ref,
                    vp_ref, mut_ref,
                    h1_ref, h2_ref, xd1_ref, xd2_ref, hf_ref, q_ref,
                    *, beta, alpha):
    vrows = vp_ref[...]            # (8, Dv) packed attention vectors

    def attention(A, support, HW, v1, v2):
        # f1 = HW @ v1 as (N,1); f2^T computed directly as (1,N) on the MXU.
        f1 = lax.dot_general(HW, v1, (((1,), (1,)), ((), ())),
                             preferred_element_type=F32)
        f2r = lax.dot_general(v2, HW, (((1,), (1,)), ((), ())),
                              preferred_element_type=F32)
        logits = A * (f1 + f2r)                      # factored: one (N,N) mul
        e = jnp.where(support, jnp.exp(jax.nn.sigmoid(logits)), 0.0)
        denom = jnp.sum(e, axis=1, keepdims=True)
        inv = pl.reciprocal(jnp.where(denom > 0.0, denom, 1.0), approx=True)
        return e * inv                               # e==0 off-support

    def run_view(a_ref, x_ref, w1_ref, w2_ref, row0):
        A = a_ref[...]
        # Softmax over the adjacency pattern (robust vs. the fragile
        # `logits != 0` mask; differs from torch's .to_sparse_coo() only when
        # a real edge's logit is exactly 0).
        support = A != 0.0
        d1 = w1_ref.shape[1]
        d2 = w2_ref.shape[1]
        # ---- encoder ----
        HW1 = jnp.dot(x_ref[...], w1_ref[...], preferred_element_type=F32)
        C1 = attention(A, support, HW1,
                       vrows[row0 + 0:row0 + 1, :d1],
                       vrows[row0 + 1:row0 + 2, :d1])
        H = jnp.dot(C1, HW1, preferred_element_type=F32)
        HW2 = jnp.dot(H, w2_ref[...], preferred_element_type=F32)
        C2 = attention(A, support, HW2,
                       vrows[row0 + 2:row0 + 3, :d2],
                       vrows[row0 + 3:row0 + 4, :d2])
        Henc = jnp.dot(C2, HW2, preferred_element_type=F32)
        # ---- decoder (tied weights: H @ W^T via trans_b dot_general) ----
        Hd = lax.dot_general(Henc, w2_ref[...], (((1,), (1,)), ((), ())),
                             preferred_element_type=F32)
        Hd = jnp.dot(C2, Hd, preferred_element_type=F32)
        Hd = lax.dot_general(Hd, w1_ref[...], (((1,), (1,)), ((), ())),
                             preferred_element_type=F32)
        Xdec = jnp.dot(C1, Hd, preferred_element_type=F32)
        return Henc, Xdec

    H1, Xd1 = run_view(a1_ref, x1_ref, w11_ref, w12_ref, 0)
    H2, Xd2 = run_view(a2_ref, x2_ref, w21_ref, w22_ref, 4)
    h1_ref[...] = H1
    h2_ref[...] = H2
    xd1_ref[...] = Xd1
    xd2_ref[...] = Xd2

    # ---- fusion + Student-t soft assignment ----
    HF = H1 + beta * H2
    hf_ref[...] = HF
    muT = mut_ref[...]                                     # (E, K)
    hf_sq = jnp.sum(HF * HF, axis=1, keepdims=True)        # (N, 1)
    mu_sq = jnp.sum(muT * muT, axis=0, keepdims=True)      # (1, K)
    cross = jnp.dot(HF, muT, preferred_element_type=F32)   # (N, K) on MXU
    dist2 = jnp.maximum(hf_sq + mu_sq - 2.0 * cross, 0.0)
    q = pl.reciprocal(1.0 + dist2 * (1.0 / alpha), approx=True)
    p = (alpha + 1.0) / 2.0
    if p == 1.5:                    # alpha == 2:  q**1.5 == q*sqrt(q)
        q = q * jnp.sqrt(q)
    elif p != 1.0:
        q = q ** p
    q_ref[...] = q * pl.reciprocal(jnp.sum(q, axis=1, keepdims=True),
                                   approx=True)


# ---------------------------------------------------------------------------
# One-time, params-dependent prep (hoisted out of the per-call path).
# ---------------------------------------------------------------------------
def prepare_inputs(params):
    """Pack the 8 attention vectors into one (8, Dv) array and pre-transpose
    mu.  Call once (or whenever params change); the hot forward does no glue."""
    names = ("v111", "v112", "v121", "v122", "v211", "v212", "v221", "v222")
    vs = [params[k].reshape(-1) for k in names]
    dv = max(int(v.shape[0]) for v in vs)
    vpack = jnp.stack([jnp.pad(v, (0, dv - int(v.shape[0]))) for v in vs], axis=0)
    return {
        "W11": params["W11"], "W12": params["W12"],
        "W21": params["W21"], "W22": params["W22"],
        "vpack": vpack, "muT": params["mu"].T,
    }


# ---------------------------------------------------------------------------
# Full MOMVFCC forward: exactly ONE pallas_call, no wrapper-side glue.
# ---------------------------------------------------------------------------
def momvfcc_forward(prepped, A, X, A2, X2, beta, alpha):
    N = A.shape[0]
    d0_1 = prepped["W11"].shape[0]
    d2_1 = prepped["W12"].shape[1]
    d0_2 = prepped["W21"].shape[0]
    d2_2 = prepped["W22"].shape[1]
    E, K = prepped["muT"].shape
    assert d2_1 == d2_2 == E, "views must share the embedding dimension"

    kern = functools.partial(_momvfcc_kernel, beta=float(beta), alpha=float(alpha))
    out_shape = (
        jax.ShapeDtypeStruct((N, d2_1), F32),   # H  (view-1 embedding)
        jax.ShapeDtypeStruct((N, d2_2), F32),   # H2 (view-2 embedding)
        jax.ShapeDtypeStruct((N, d0_1), F32),   # X_  (view-1 reconstruction)
        jax.ShapeDtypeStruct((N, d0_2), F32),   # X_2 (view-2 reconstruction)
        jax.ShapeDtypeStruct((N, E), F32),      # H_F
        jax.ShapeDtypeStruct((N, K), F32),      # q
    )
    H1, H2, X_, X_2, HF, q = pl.pallas_call(
        kern,
        out_shape=out_shape,
        in_specs=_whole(10),
        out_specs=tuple(_whole(6)),
    )(A, X, prepped["W11"], prepped["W12"],
      A2, X2, prepped["W21"], prepped["W22"],
      prepped["vpack"], prepped["muT"])

    # TODO(synk): kmeans-based centroid (re)initialization
    # (get_assign_cluster_centers_op) is not part of forward() and is omitted.
    # TODO(synk): for non-toy N (thousands of nodes) switch to row-tiled
    # (TILE_N, N) BlockSpecs with lane-dense (multiple-of-128) output layouts,
    # bf16 (N,N) tiles with f32 accumulation, and size the tiles to v7x's
    # 64 MiB VMEM (a plan that fits v5e/v6e's 128 MiB will not fit there);
    # at scale the binding slot is the EUP/VPU softmax stream and the store
    # path, not the MXU.
    return HF, q, H1, H2, X_, X_2


# ---------------------------------------------------------------------------
# Pure-JAX reference (mirrors the PyTorch math) for correctness checking
# ---------------------------------------------------------------------------
def _ref_attention(A, H, v1, v2):
    f1 = H @ v1
    f2 = H @ v2
    logits = A * (f1 + f2.T)
    mask = A != 0.0
    e = jnp.where(mask, jnp.exp(jax.nn.sigmoid(logits)), 0.0)
    denom = jnp.sum(e, axis=1, keepdims=True)
    return e / jnp.where(denom > 0.0, denom, 1.0)


def ref_forward(params, A, X, A2, X2, beta, alpha):
    def run_view(Ad, Xd, Ws, vs):
        C = []
        H = Xd
        for W, (v1, v2) in zip(Ws, vs):
            H = H @ W
            c = _ref_attention(Ad, H, v1, v2)
            C.append(c)
            H = c @ H
        Henc = H
        for W, c in zip(reversed(Ws), reversed(C)):
            H = H @ W.T
            H = c @ H
        return Henc, H

    H1, X_ = run_view(
        A, X, [params["W11"], params["W12"]],
        [(params["v111"], params["v112"]), (params["v121"], params["v122"])])
    H2, X_2 = run_view(
        A2, X2, [params["W21"], params["W22"]],
        [(params["v211"], params["v212"]), (params["v221"], params["v222"])])
    HF = H1 + H2 * beta
    mu = params["mu"]
    dist2 = jnp.sum((HF[:, None, :] - mu[None, :, :]) ** 2, axis=2)
    q = 1.0 / (1.0 + dist2 / alpha)
    q = q ** ((alpha + 1.0) / 2.0)
    q = q / jnp.sum(q, axis=1, keepdims=True)
    return HF, q, H1, H2, X_, X_2


# ---------------------------------------------------------------------------
def _xavier(key, shape):
    fan_in, fan_out = shape[0], shape[1]
    limit = (6.0 / (fan_in + fan_out)) ** 0.5
    return jax.random.uniform(key, shape, jnp.float32, -limit, limit)


if __name__ == "__main__":
    # small, forward-consistent shapes
    N = 16                        # args.n_sample
    hidden_dims1 = [32, 64, 16]
    hidden_dims2 = [24, 48, 16]
    n_cluster = 4                 # args.cluster
    embedding = hidden_dims1[-1]  # args.embedding
    alpha = 2.0                   # args.alpha
    beta = 0.5                    # args.beta

    key = jax.random.PRNGKey(0)
    ks = jax.random.split(key, 20)

    params = {
        "W11": _xavier(ks[0], (hidden_dims1[0], hidden_dims1[1])),
        "v111": _xavier(ks[1], (hidden_dims1[1], 1)),
        "v112": _xavier(ks[2], (hidden_dims1[1], 1)),
        "W12": _xavier(ks[3], (hidden_dims1[1], hidden_dims1[2])),
        "v121": _xavier(ks[4], (hidden_dims1[2], 1)),
        "v122": _xavier(ks[5], (hidden_dims1[2], 1)),
        "W21": _xavier(ks[6], (hidden_dims2[0], hidden_dims2[1])),
        "v211": _xavier(ks[7], (hidden_dims2[1], 1)),
        "v212": _xavier(ks[8], (hidden_dims2[1], 1)),
        "W22": _xavier(ks[9], (hidden_dims2[1], hidden_dims2[2])),
        "v221": _xavier(ks[10], (hidden_dims2[2], 1)),
        "v222": _xavier(ks[11], (hidden_dims2[2], 1)),
        "mu": _xavier(ks[12], (n_cluster, embedding)),
    }

    # adjacency matrices: symmetric binary with self-loops
    def make_adj(k):
        a = (jax.random.uniform(k, (N, N)) < 0.35).astype(jnp.float32)
        a = jnp.minimum(a + a.T + jnp.eye(N, dtype=jnp.float32), 1.0)
        return a

    A = make_adj(ks[13])
    A2 = make_adj(ks[14])
    X = jax.random.normal(ks[15], (N, hidden_dims1[0]), jnp.float32)
    X2 = jax.random.normal(ks[16], (N, hidden_dims2[0]), jnp.float32)

    # One-time prep (hoisted out of the hot path), then the fused forward.
    prepped = prepare_inputs(params)
    fwd = jax.jit(momvfcc_forward, static_argnums=(5, 6))
    outs = fwd(prepped, A, X, A2, X2, beta, alpha)
    outs = jax.block_until_ready(outs)

    refs = ref_forward(params, A, X, A2, X2, beta, alpha)
    names = ["H_F", "q", "H", "H2", "X_", "X_2"]
    # 2e-3 tolerance: pl.reciprocal(approx=True) introduces ~1e-4..1e-3-level
    # relative error on the softmax / q normalizations.
    for name, o, r in zip(names, outs, refs):
        np.testing.assert_allclose(np.asarray(o), np.asarray(r),
                                   rtol=2e-3, atol=2e-3, err_msg=name)

    print("KERNEL_OK")
</pallas_src>

<mosaic_0001>
module attributes {stable_mosaic.version = 11 : i64} {
  func.func @_momvfcc_kernel(%arg0: memref<16x16xf32, #tpu.memory_space<vmem>>, %arg1: memref<16x32xf32, #tpu.memory_space<vmem>>, %arg2: memref<32x64xf32, #tpu.memory_space<vmem>>, %arg3: memref<64x16xf32, #tpu.memory_space<vmem>>, %arg4: memref<16x16xf32, #tpu.memory_space<vmem>>, %arg5: memref<16x24xf32, #tpu.memory_space<vmem>>, %arg6: memref<24x48xf32, #tpu.memory_space<vmem>>, %arg7: memref<48x16xf32, #tpu.memory_space<vmem>>, %arg8: memref<8x64xf32, #tpu.memory_space<vmem>>, %arg9: memref<16x4xf32, #tpu.memory_space<vmem>>, %arg10: memref<16x16xf32, #tpu.memory_space<vmem>>, %arg11: memref<16x16xf32, #tpu.memory_space<vmem>>, %arg12: memref<16x32xf32, #tpu.memory_space<vmem>>, %arg13: memref<16x24xf32, #tpu.memory_space<vmem>>, %arg14: memref<16x16xf32, #tpu.memory_space<vmem>>, %arg15: memref<16x4xf32, #tpu.memory_space<vmem>>) attributes {dimension_semantics = [], scalar_prefetch = 0 : i64, scratch_operands = 0 : i64, tpu.core_type = #tpu.core_type<tc>} {
    %c0 = arith.constant 0 : index
    %c0_0 = arith.constant 0 : index
    %0 = vector.load %arg8[%c0, %c0_0] : memref<8x64xf32, #tpu.memory_space<vmem>>, vector<8x64xf32>
    %c0_1 = arith.constant 0 : index
    %c0_2 = arith.constant 0 : index
    %1 = vector.load %arg0[%c0_1, %c0_2] : memref<16x16xf32, #tpu.memory_space<vmem>>, vector<16x16xf32>
    %cst = arith.constant 0.000000e+00 : f32
    %2 = vector.broadcast %cst : f32 to vector<16x16xf32>
    %3 = arith.cmpf one, %1, %2 : vector<16x16xf32>
    %c0_3 = arith.constant 0 : index
    %c0_4 = arith.constant 0 : index
    %4 = vector.load %arg1[%c0_3, %c0_4] : memref<16x32xf32, #tpu.memory_space<vmem>>, vector<16x32xf32>
    %c0_5 = arith.constant 0 : index
    %c0_6 = arith.constant 0 : index
    %5 = vector.load %arg2[%c0_5, %c0_6] : memref<32x64xf32, #tpu.memory_space<vmem>>, vector<32x64xf32>
    %cst_7 = arith.constant dense<0.000000e+00> : vector<16x64xf32>
    %6 = tpu.matmul %4, %5, %cst_7 {dimension_numbers = #tpu.dot_dimension_numbers<[1], [0], [0], [1], [0, 0, 1, 1], [], []>} : vector<16x32xf32>, vector<32x64xf32>, vector<16x64xf32> -> vector<16x64xf32>
    %7 = vector.extract_strided_slice %0 {offsets = [0, 0], sizes = [1, 64], strides = [1, 1]} : vector<8x64xf32> to vector<1x64xf32>
    %8 = vector.extract_strided_slice %0 {offsets = [1, 0], sizes = [1, 64], strides = [1, 1]} : vector<8x64xf32> to vector<1x64xf32>
    %cst_8 = arith.constant dense<0.000000e+00> : vector<16x1xf32>
    %9 = tpu.matmul %6, %7, %cst_8 {dimension_numbers = #tpu.dot_dimension_numbers<[1], [1], [0], [0], [0, 0, 1, 0], [], []>} : vector<16x64xf32>, vector<1x64xf32>, vector<16x1xf32> -> vector<16x1xf32>
    %cst_9 = arith.constant dense<0.000000e+00> : vector<1x16xf32>
    %10 = tpu.matmul %8, %6, %cst_9 {dimension_numbers = #tpu.dot_dimension_numbers<[1], [1], [0], [0], [0, 0, 1, 0], [], []>} : vector<1x64xf32>, vector<16x64xf32>, vector<1x16xf32> -> vector<1x16xf32>
    %11 = vector.broadcast %9 : vector<16x1xf32> to vector<16x16xf32>
    %12 = vector.broadcast %10 : vector<1x16xf32> to vector<16x16xf32>
    %13 = arith.addf %11, %12 : vector<16x16xf32>
    %14 = arith.mulf %1, %13 : vector<16x16xf32>
    %15 = arith.negf %14 : vector<16x16xf32>
    %16 = math.exp %15 : vector<16x16xf32>
    %cst_10 = arith.constant 1.000000e+00 : f32
    %17 = vector.broadcast %cst_10 : f32 to vector<16x16xf32>
    %18 = arith.addf %17, %16 : vector<16x16xf32>
    %19 = arith.divf %17, %18 : vector<16x16xf32>
    %20 = math.exp %19 : vector<16x16xf32>
    %cst_11 = arith.constant 0.000000e+00 : f32
    %21 = vector.broadcast %cst_11 : f32 to vector<16x16xf32>
    %22 = arith.select %3, %20, %21 : vector<16x16xi1>, vector<16x16xf32>
    %cst_12 = arith.constant dense<0.000000e+00> : vector<16xf32>
    %23 = vector.multi_reduction <add>, %22, %cst_12 [1] : vector<16x16xf32> to vector<16xf32>
    %24 = vector.shape_cast %23 : vector<16xf32> to vector<16x1xf32>
    %cst_13 = arith.constant 0.000000e+00 : f32
    %25 = vector.broadcast %cst_13 : f32 to vector<16x1xf32>
    %26 = arith.cmpf ogt, %24, %25 : vector<16x1xf32>
    %cst_14 = arith.constant 1.000000e+00 : f32
    %27 = vector.broadcast %cst_14 : f32 to vector<16x1xf32>
    %28 = arith.select %26, %24, %27 : vector<16x1xi1>, vector<16x1xf32>
    %29 = tpu.reciprocal %28 {approx = true} : vector<16x1xf32> -> vector<16x1xf32>
    %30 = vector.broadcast %29 : vector<16x1xf32> to vector<16x16xf32>
    %31 = arith.mulf %22, %30 : vector<16x16xf32>
    %cst_15 = arith.constant dense<0.000000e+00> : vector<16x64xf32>
    %32 = tpu.matmul %31, %6, %cst_15 {dimension_numbers = #tpu.dot_dimension_numbers<[1], [0], [0], [1], [0, 0, 1, 1], [], []>} : vector<16x16xf32>, vector<16x64xf32>, vector<16x64xf32> -> vector<16x64xf32>
    %c0_16 = arith.constant 0 : index
    %c0_17 = arith.constant 0 : index
    %33 = vector.load %arg3[%c0_16, %c0_17] : memref<64x16xf32, #tpu.memory_space<vmem>>, vector<64x16xf32>
    %cst_18 = arith.constant dense<0.000000e+00> : vector<16x16xf32>
    %34 = tpu.matmul %32, %33, %cst_18 {dimension_numbers = #tpu.dot_dimension_numbers<[1], [0], [0], [1], [0, 0, 1, 1], [], []>} : vector<16x64xf32>, vector<64x16xf32>, vector<16x16xf32> -> vector<16x16xf32>
    %35 = vector.extract_strided_slice %0 {offsets = [2, 0], sizes = [1, 16], strides = [1, 1]} : vector<8x64xf32> to vector<1x16xf32>
    %36 = vector.extract_strided_slice %0 {offsets = [3, 0], sizes = [1, 16], strides = [1, 1]} : vector<8x64xf32> to vector<1x16xf32>
    %cst_19 = arith.constant dense<0.000000e+00> : vector<16x1xf32>
    %37 = tpu.matmul %34, %35, %cst_19 {dimension_numbers = #tpu.dot_dimension_numbers<[1], [1], [0], [0], [0, 0, 1, 0], [], []>} : vector<16x16xf32>, vector<1x16xf32>, vector<16x1xf32> -> vector<16x1xf32>
    %cst_20 = arith.constant dense<0.000000e+00> : vector<1x16xf32>
    %38 = tpu.matmul %36, %34, %cst_20 {dimension_numbers = #tpu.dot_dimension_numbers<[1], [1], [0], [0], [0, 0, 1, 0], [], []>} : vector<1x16xf32>, vector<16x16xf32>, vector<1x16xf32> -> vector<1x16xf32>
    %39 = vector.broadcast %37 : vector<16x1xf32> to vector<16x16xf32>
    %40 = vector.broadcast %38 : vector<1x16xf32> to vector<16x16xf32>
    %41 = arith.addf %39, %40 : vector<16x16xf32>
    %42 = arith.mulf %1, %41 : vector<16x16xf32>
    %43 = arith.negf %42 : vector<16x16xf32>
    %44 = math.exp %43 : vector<16x16xf32>
    %cst_21 = arith.constant 1.000000e+00 : f32
    %45 = vector.broadcast %cst_21 : f32 to vector<16x16xf32>
    %46 = arith.addf %45, %44 : vector<16x16xf32>
    %47 = arith.divf %45, %46 : vector<16x16xf32>
    %48 = math.exp %47 : vector<16x16xf32>
    %cst_22 = arith.constant 0.000000e+00 : f32
    %49 = vector.broadcast %cst_22 : f32 to vector<16x16xf32>
    %50 = arith.select %3, %48, %49 : vector<16x16xi1>, vector<16x16xf32>
    %cst_23 = arith.constant dense<0.000000e+00> : vector<16xf32>
    %51 = vector.multi_reduction <add>, %50, %cst_23 [1] : vector<16x16xf32> to vector<16xf32>
    %52 = vector.shape_cast %51 : vector<16xf32> to vector<16x1xf32>
    %cst_24 = arith.constant 0.000000e+00 : f32
    %53 = vector.broadcast %cst_24 : f32 to vector<16x1xf32>
    %54 = arith.cmpf ogt, %52, %53 : vector<16x1xf32>
    %cst_25 = arith.constant 1.000000e+00 : f32
    %55 = vector.broadcast %cst_25 : f32 to vector<16x1xf32>
    %56 = arith.select %54, %52, %55 : vector<16x1xi1>, vector<16x1xf32>
    %57 = tpu.reciprocal %56 {approx = true} : vector<16x1xf32> -> vector<16x1xf32>
    %58 = vector.broadcast %57 : vector<16x1xf32> to vector<16x16xf32>
    %59 = arith.mulf %50, %58 : vector<16x16xf32>
    %cst_26 = arith.constant dense<0.000000e+00> : vector<16x16xf32>
    %60 = tpu.matmul %59, %34, %cst_26 {dimension_numbers = #tpu.dot_dimension_numbers<[1], [0], [0], [1], [0, 0, 1, 1], [], []>} : vector<16x16xf32>, vector<16x16xf32>, vector<16x16xf32> -> vector<16x16xf32>
    %c0_27 = arith.constant 0 : index
    %c0_28 = arith.constant 0 : index
    %61 = vector.load %arg3[%c0_27, %c0_28] : memref<64x16xf32, #tpu.memory_space<vmem>>, vector<64x16xf32>
    %cst_29 = arith.constant dense<0.000000e+00> : vector<16x64xf32>
    %62 = tpu.matmul %60, %61, %cst_29 {dimension_numbers = #tpu.dot_dimension_numbers<[1], [1], [0], [0], [0, 0, 1, 0], [], []>} : vector<16x16xf32>, vector<64x16xf32>, vector<16x64xf32> -> vector<16x64xf32>
    %cst_30 = arith.constant dense<0.000000e+00> : vector<16x64xf32>
    %63 = tpu.matmul %59, %62, %cst_30 {dimension_numbers = #tpu.dot_dimension_numbers<[1], [0], [0], [1], [0, 0, 1, 1], [], []>} : vector<16x16xf32>, vector<16x64xf32>, vector<16x64xf32> -> vector<16x64xf32>
    %c0_31 = arith.constant 0 : index
    %c0_32 = arith.constant 0 : index
    %64 = vector.load %arg2[%c0_31, %c0_32] : memref<32x64xf32, #tpu.memory_space<vmem>>, vector<32x64xf32>
    %cst_33 = arith.constant dense<0.000000e+00> : vector<16x32xf32>
    %65 = tpu.matmul %63, %64, %cst_33 {dimension_numbers = #tpu.dot_dimension_numbers<[1], [1], [0], [0], [0, 0, 1, 0], [], []>} : vector<16x64xf32>, vector<32x64xf32>, vector<16x32xf32> -> vector<16x32xf32>
    %cst_34 = arith.constant dense<0.000000e+00> : vector<16x32xf32>
    %66 = tpu.matmul %31, %65, %cst_34 {dimension_numbers = #tpu.dot_dimension_numbers<[1], [0], [0], [1], [0, 0, 1, 1], [], []>} : vector<16x16xf32>, vector<16x32xf32>, vector<16x32xf32> -> vector<16x32xf32>
    %c0_35 = arith.constant 0 : index
    %c0_36 = arith.constant 0 : index
    %67 = vector.load %arg4[%c0_35, %c0_36] : memref<16x16xf32, #tpu.memory_space<vmem>>, vector<16x16xf32>
    %cst_37 = arith.constant 0.000000e+00 : f32
    %68 = vector.broadcast %cst_37 : f32 to vector<16x16xf32>
    %69 = arith.cmpf one, %67, %68 : vector<16x16xf32>
    %c0_38 = arith.constant 0 : index
    %c0_39 = arith.constant 0 : index
    %70 = vector.load %arg5[%c0_38, %c0_39] : memref<16x24xf32, #tpu.memory_space<vmem>>, vector<16x24xf32>
    %c0_40 = arith.constant 0 : index
    %c0_41 = arith.constant 0 : index
    %71 = vector.load %arg6[%c0_40, %c0_41] : memref<24x48xf32, #tpu.memory_space<vmem>>, vector<24x48xf32>
    %cst_42 = arith.constant dense<0.000000e+00> : vector<16x48xf32>
    %72 = tpu.matmul %70, %71, %cst_42 {dimension_numbers = #tpu.dot_dimension_numbers<[1], [0], [0], [1], [0, 0, 1, 1], [], []>} : vector<16x24xf32>, vector<24x48xf32>, vector<16x48xf32> -> vector<16x48xf32>
    %73 = vector.extract_strided_slice %0 {offsets = [4, 0], sizes = [1, 48], strides = [1, 1]} : vector<8x64xf32> to vector<1x48xf32>
    %74 = vector.extract_strided_slice %0 {offsets = [5, 0], sizes = [1, 48], strides = [1, 1]} : vector<8x64xf32> to vector<1x48xf32>
    %cst_43 = arith.constant dense<0.000000e+00> : vector<16x1xf32>
    %75 = tpu.matmul %72, %73, %cst_43 {dimension_numbers = #tpu.dot_dimension_numbers<[1], [1], [0], [0], [0, 0, 1, 0], [], []>} : vector<16x48xf32>, vector<1x48xf32>, vector<16x1xf32> -> vector<16x1xf32>
    %cst_44 = arith.constant dense<0.000000e+00> : vector<1x16xf32>
    %76 = tpu.matmul %74, %72, %cst_44 {dimension_numbers = #tpu.dot_dimension_numbers<[1], [1], [0], [0], [0, 0, 1, 0], [], []>} : vector<1x48xf32>, vector<16x48xf32>, vector<1x16xf32> -> vector<1x16xf32>
    %77 = vector.broadcast %75 : vector<16x1xf32> to vector<16x16xf32>
    %78 = vector.broadcast %76 : vector<1x16xf32> to vector<16x16xf32>
    %79 = arith.addf %77, %78 : vector<16x16xf32>
    %80 = arith.mulf %67, %79 : vector<16x16xf32>
    %81 = arith.negf %80 : vector<16x16xf32>
    %82 = math.exp %81 : vector<16x16xf32>
    %cst_45 = arith.constant 1.000000e+00 : f32
    %83 = vector.broadcast %cst_45 : f32 to vector<16x16xf32>
    %84 = arith.addf %83, %82 : vector<16x16xf32>
    %85 = arith.divf %83, %84 : vector<16x16xf32>
    %86 = math.exp %85 : vector<16x16xf32>
    %cst_46 = arith.constant 0.000000e+00 : f32
    %87 = vector.broadcast %cst_46 : f32 to vector<16x16xf32>
    %88 = arith.select %69, %86, %87 : vector<16x16xi1>, vector<16x16xf32>
    %cst_47 = arith.constant dense<0.000000e+00> : vector<16xf32>
    %89 = vector.multi_reduction <add>, %88, %cst_47 [1] : vector<16x16xf32> to vector<16xf32>
    %90 = vector.shape_cast %89 : vector<16xf32> to vector<16x1xf32>
    %cst_48 = arith.constant 0.000000e+00 : f32
    %91 = vector.broadcast %cst_48 : f32 to vector<16x1xf32>
    %92 = arith.cmpf ogt, %90, %91 : vector<16x1xf32>
    %cst_49 = arith.constant 1.000000e+00 : f32
    %93 = vector.broadcast %cst_49 : f32 to vector<16x1xf32>
    %94 = arith.select %92, %90, %93 : vector<16x1xi1>, vector<16x1xf32>
    %95 = tpu.reciprocal %94 {approx = true} : vector<16x1xf32> -> vector<16x1xf32>
    %96 = vector.broadcast %95 : vector<16x1xf32> to vector<16x16xf32>
    %97 = arith.mulf %88, %96 : vector<16x16xf32>
    %cst_50 = arith.constant dense<0.000000e+00> : vector<16x48xf32>
    %98 = tpu.matmul %97, %72, %cst_50 {dimension_numbers = #tpu.dot_dimension_numbers<[1], [0], [0], [1], [0, 0, 1, 1], [], []>} : vector<16x16xf32>, vector<16x48xf32>, vector<16x48xf32> -> vector<16x48xf32>
    %c0_51 = arith.constant 0 : index
    %c0_52 = arith.constant 0 : index
    %99 = vector.load %arg7[%c0_51, %c0_52] : memref<48x16xf32, #tpu.memory_space<vmem>>, vector<48x16xf32>
    %cst_53 = arith.constant dense<0.000000e+00> : vector<16x16xf32>
    %100 = tpu.matmul %98, %99, %cst_53 {dimension_numbers = #tpu.dot_dimension_numbers<[1], [0], [0], [1], [0, 0, 1, 1], [], []>} : vector<16x48xf32>, vector<48x16xf32>, vector<16x16xf32> -> vector<16x16xf32>
    %101 = vector.extract_strided_slice %0 {offsets = [6, 0], sizes = [1, 16], strides = [1, 1]} : vector<8x64xf32> to vector<1x16xf32>
    %102 = vector.extract_strided_slice %0 {offsets = [7, 0], sizes = [1, 16], strides = [1, 1]} : vector<8x64xf32> to vector<1x16xf32>
    %cst_54 = arith.constant dense<0.000000e+00> : vector<16x1xf32>
    %103 = tpu.matmul %100, %101, %cst_54 {dimension_numbers = #tpu.dot_dimension_numbers<[1], [1], [0], [0], [0, 0, 1, 0], [], []>} : vector<16x16xf32>, vector<1x16xf32>, vector<16x1xf32> -> vector<16x1xf32>
    %cst_55 = arith.constant dense<0.000000e+00> : vector<1x16xf32>
    %104 = tpu.matmul %102, %100, %cst_55 {dimension_numbers = #tpu.dot_dimension_numbers<[1], [1], [0], [0], [0, 0, 1, 0], [], []>} : vector<1x16xf32>, vector<16x16xf32>, vector<1x16xf32> -> vector<1x16xf32>
    %105 = vector.broadcast %103 : vector<16x1xf32> to vector<16x16xf32>
    %106 = vector.broadcast %104 : vector<1x16xf32> to vector<16x16xf32>
    %107 = arith.addf %105, %106 : vector<16x16xf32>
    %108 = arith.mulf %67, %107 : vector<16x16xf32>
    %109 = arith.negf %108 : vector<16x16xf32>
    %110 = math.exp %109 : vector<16x16xf32>
    %cst_56 = arith.constant 1.000000e+00 : f32
    %111 = vector.broadcast %cst_56 : f32 to vector<16x16xf32>
    %112 = arith.addf %111, %110 : vector<16x16xf32>
    %113 = arith.divf %111, %112 : vector<16x16xf32>
    %114 = math.exp %113 : vector<16x16xf32>
    %cst_57 = arith.constant 0.000000e+00 : f32
    %115 = vector.broadcast %cst_57 : f32 to vector<16x16xf32>
    %116 = arith.select %69, %114, %115 : vector<16x16xi1>, vector<16x16xf32>
    %cst_58 = arith.constant dense<0.000000e+00> : vector<16xf32>
    %117 = vector.multi_reduction <add>, %116, %cst_58 [1] : vector<16x16xf32> to vector<16xf32>
    %118 = vector.shape_cast %117 : vector<16xf32> to vector<16x1xf32>
    %cst_59 = arith.constant 0.000000e+00 : f32
    %119 = vector.broadcast %cst_59 : f32 to vector<16x1xf32>
    %120 = arith.cmpf ogt, %118, %119 : vector<16x1xf32>
    %cst_60 = arith.constant 1.000000e+00 : f32
    %121 = vector.broadcast %cst_60 : f32 to vector<16x1xf32>
    %122 = arith.select %120, %118, %121 : vector<16x1xi1>, vector<16x1xf32>
    %123 = tpu.reciprocal %122 {approx = true} : vector<16x1xf32> -> vector<16x1xf32>
    %124 = vector.broadcast %123 : vector<16x1xf32> to vector<16x16xf32>
    %125 = arith.mulf %116, %124 : vector<16x16xf32>
    %cst_61 = arith.constant dense<0.000000e+00> : vector<16x16xf32>
    %126 = tpu.matmul %125, %100, %cst_61 {dimension_numbers = #tpu.dot_dimension_numbers<[1], [0], [0], [1], [0, 0, 1, 1], [], []>} : vector<16x16xf32>, vector<16x16xf32>, vector<16x16xf32> -> vector<16x16xf32>
    %c0_62 = arith.constant 0 : index
    %c0_63 = arith.constant 0 : index
    %127 = vector.load %arg7[%c0_62, %c0_63] : memref<48x16xf32, #tpu.memory_space<vmem>>, vector<48x16xf32>
    %cst_64 = arith.constant dense<0.000000e+00> : vector<16x48xf32>
    %128 = tpu.matmul %126, %127, %cst_64 {dimension_numbers = #tpu.dot_dimension_numbers<[1], [1], [0], [0], [0, 0, 1, 0], [], []>} : vector<16x16xf32>, vector<48x16xf32>, vector<16x48xf32> -> vector<16x48xf32>
    %cst_65 = arith.constant dense<0.000000e+00> : vector<16x48xf32>
    %129 = tpu.matmul %125, %128, %cst_65 {dimension_numbers = #tpu.dot_dimension_numbers<[1], [0], [0], [1], [0, 0, 1, 1], [], []>} : vector<16x16xf32>, vector<16x48xf32>, vector<16x48xf32> -> vector<16x48xf32>
    %c0_66 = arith.constant 0 : index
    %c0_67 = arith.constant 0 : index
    %130 = vector.load %arg6[%c0_66, %c0_67] : memref<24x48xf32, #tpu.memory_space<vmem>>, vector<24x48xf32>
    %cst_68 = arith.constant dense<0.000000e+00> : vector<16x24xf32>
    %131 = tpu.matmul %129, %130, %cst_68 {dimension_numbers = #tpu.dot_dimension_numbers<[1], [1], [0], [0], [0, 0, 1, 0], [], []>} : vector<16x48xf32>, vector<24x48xf32>, vector<16x24xf32> -> vector<16x24xf32>
    %cst_69 = arith.constant dense<0.000000e+00> : vector<16x24xf32>
    %132 = tpu.matmul %97, %131, %cst_69 {dimension_numbers = #tpu.dot_dimension_numbers<[1], [0], [0], [1], [0, 0, 1, 1], [], []>} : vector<16x16xf32>, vector<16x24xf32>, vector<16x24xf32> -> vector<16x24xf32>
    %c0_70 = arith.constant 0 : index
    %c0_71 = arith.constant 0 : index
    %133 = vector.load %arg10[%c0_70, %c0_71] : memref<16x16xf32, #tpu.memory_space<vmem>>, vector<16x16xf32>
    tpu.vector_store %arg10[%c0_70, %c0_71], %60 {strides = array<i32>} : memref<16x16xf32, #tpu.memory_space<vmem>>, vector<16x16xf32>,
    %c0_72 = arith.constant 0 : index
    %c0_73 = arith.constant 0 : index
    %134 = vector.load %arg11[%c0_72, %c0_73] : memref<16x16xf32, #tpu.memory_space<vmem>>, vector<16x16xf32>
    tpu.vector_store %arg11[%c0_72, %c0_73], %126 {strides = array<i32>} : memref<16x16xf32, #tpu.memory_space<vmem>>, vector<16x16xf32>,
    %c0_74 = arith.constant 0 : index
    %c0_75 = arith.constant 0 : index
    %135 = vector.load %arg12[%c0_74, %c0_75] : memref<16x32xf32, #tpu.memory_space<vmem>>, vector<16x32xf32>
    tpu.vector_store %arg12[%c0_74, %c0_75], %66 {strides = array<i32>} : memref<16x32xf32, #tpu.memory_space<vmem>>, vector<16x32xf32>,
    %c0_76 = arith.constant 0 : index
    %c0_77 = arith.constant 0 : index
    %136 = vector.load %arg13[%c0_76, %c0_77] : memref<16x24xf32, #tpu.memory_space<vmem>>, vector<16x24xf32>
    tpu.vector_store %arg13[%c0_76, %c0_77], %132 {strides = array<i32>} : memref<16x24xf32, #tpu.memory_space<vmem>>, vector<16x24xf32>,
    %cst_78 = arith.constant 5.000000e-01 : f32
    %137 = vector.broadcast %cst_78 : f32 to vector<16x16xf32>
    %138 = arith.mulf %137, %126 : vector<16x16xf32>
    %139 = arith.addf %60, %138 : vector<16x16xf32>
    %c0_79 = arith.constant 0 : index
    %c0_80 = arith.constant 0 : index
    %140 = vector.load %arg14[%c0_79, %c0_80] : memref<16x16xf32, #tpu.memory_space<vmem>>, vector<16x16xf32>
    tpu.vector_store %arg14[%c0_79, %c0_80], %139 {strides = array<i32>} : memref<16x16xf32, #tpu.memory_space<vmem>>, vector<16x16xf32>,
    %c0_81 = arith.constant 0 : index
    %c0_82 = arith.constant 0 : index
    %141 = vector.load %arg9[%c0_81, %c0_82] : memref<16x4xf32, #tpu.memory_space<vmem>>, vector<16x4xf32>
    %142 = arith.mulf %139, %139 : vector<16x16xf32>
    %cst_83 = arith.constant dense<0.000000e+00> : vector<16xf32>
    %143 = vector.multi_reduction <add>, %142, %cst_83 [1] : vector<16x16xf32> to vector<16xf32>
    %144 = vector.shape_cast %143 : vector<16xf32> to vector<16x1xf32>
    %145 = arith.mulf %141, %141 : vector<16x4xf32>
    %cst_84 = arith.constant dense<0.000000e+00> : vector<4xf32>
    %146 = vector.multi_reduction <add>, %145, %cst_84 [0] : vector<16x4xf32> to vector<4xf32>
    %147 = vector.shape_cast %146 : vector<4xf32> to vector<1x4xf32>
    %cst_85 = arith.constant dense<0.000000e+00> : vector<16x4xf32>
    %148 = tpu.matmul %139, %141, %cst_85 {dimension_numbers = #tpu.dot_dimension_numbers<[1], [0], [0], [1], [0, 0, 1, 1], [], []>} : vector<16x16xf32>, vector<16x4xf32>, vector<16x4xf32> -> vector<16x4xf32>
    %149 = vector.broadcast %144 : vector<16x1xf32> to vector<16x4xf32>
    %150 = vector.broadcast %147 : vector<1x4xf32> to vector<16x4xf32>
    %151 = arith.addf %149, %150 : vector<16x4xf32>
    %cst_86 = arith.constant 2.000000e+00 : f32
    %152 = vector.broadcast %cst_86 : f32 to vector<16x4xf32>
    %153 = arith.mulf %152, %148 : vector<16x4xf32>
    %154 = arith.subf %151, %153 : vector<16x4xf32>
    %cst_87 = arith.constant 0.000000e+00 : f32
    %155 = vector.broadcast %cst_87 : f32 to vector<16x4xf32>
    %156 = arith.maximumf %154, %155 : vector<16x4xf32>
    %cst_88 = arith.constant 5.000000e-01 : f32
    %157 = vector.broadcast %cst_88 : f32 to vector<16x4xf32>
    %158 = arith.mulf %156, %157 : vector<16x4xf32>
    %cst_89 = arith.constant 1.000000e+00 : f32
    %159 = vector.broadcast %cst_89 : f32 to vector<16x4xf32>
    %160 = arith.addf %159, %158 : vector<16x4xf32>
    %161 = tpu.reciprocal %160 {approx = true} : vector<16x4xf32> -> vector<16x4xf32>
    %162 = math.sqrt %161 : vector<16x4xf32>
    %163 = arith.mulf %161, %162 : vector<16x4xf32>
    %cst_90 = arith.constant dense<0.000000e+00> : vector<16xf32>
    %164 = vector.multi_reduction <add>, %163, %cst_90 [1] : vector<16x4xf32> to vector<16xf32>
    %165 = vector.shape_cast %164 : vector<16xf32> to vector<16x1xf32>
    %166 = tpu.reciprocal %165 {approx = true} : vector<16x1xf32> -> vector<16x1xf32>
    %167 = vector.broadcast %166 : vector<16x1xf32> to vector<16x4xf32>
    %168 = arith.mulf %163, %167 : vector<16x4xf32>
    %c0_91 = arith.constant 0 : index
    %c0_92 = arith.constant 0 : index
    %169 = vector.load %arg15[%c0_91, %c0_92] : memref<16x4xf32, #tpu.memory_space<vmem>>, vector<16x4xf32>
    tpu.vector_store %arg15[%c0_91, %c0_92], %168 {strides = array<i32>} : memref<16x4xf32, #tpu.memory_space<vmem>>, vector<16x4xf32>,
    return
  }
}

</mosaic_0001>

<llo_original>
// kernel: momvfcc_forward.1
$region0: #{momvfcc_forward.1}
  #allocation0 [shape = 'u32[]', space=smem, size = 0x4, offset = 0x4, fixed_abs, tag = 'smem constant byte address 0x4 - core index']
  #allocation1 [shape = 'u32[72,128]{1,0:T(1,128)}', space=vmem, size = 0x9000, scoped, tag = 'internal scratch']
  %s0 = inlined_call_operand.vmem [shape: f32[16,16], index: 0, kind: input, shape index: {}]
  %s1 = inlined_call_operand.vmem [shape: f32[16,32], index: 1, kind: input, shape index: {}]
  %s2 = inlined_call_operand.vmem [shape: f32[32,64], index: 2, kind: input, shape index: {}]
  %s3 = inlined_call_operand.vmem [shape: f32[64,16], index: 3, kind: input, shape index: {}]
  %s4 = inlined_call_operand.vmem [shape: f32[16,16], index: 4, kind: input, shape index: {}]
  %s5 = inlined_call_operand.vmem [shape: f32[16,24], index: 5, kind: input, shape index: {}]
  %s6 = inlined_call_operand.vmem [shape: f32[24,48], index: 6, kind: input, shape index: {}]
  %s7 = inlined_call_operand.vmem [shape: f32[48,16], index: 7, kind: input, shape index: {}]
  %s8 = inlined_call_operand.vmem [shape: f32[8,64], index: 8, kind: input, shape index: {}]
  %s9 = inlined_call_operand.vmem [shape: f32[16,4], index: 9, kind: input, shape index: {}]
  %s10 = inlined_call_operand.hbm [shape: f32[16,16], index: 10, kind: output, shape index: {0}]
  %s11 = inlined_call_operand.hbm [shape: f32[16,16], index: 11, kind: output, shape index: {1}]
  %s12 = inlined_call_operand.hbm [shape: f32[16,32], index: 12, kind: output, shape index: {2}]
  %s13 = inlined_call_operand.hbm [shape: f32[16,24], index: 13, kind: output, shape index: {3}]
  %s14 = inlined_call_operand.hbm [shape: f32[16,16], index: 14, kind: output, shape index: {4}]
  %s15 = inlined_call_operand.vmem [shape: f32[16,4], index: 15, kind: output, shape index: {5}]
  %16 = xla_tuple %s10, %s11, %s12, %s13, %s14, %s15
  %s17 = sld [smem:[#allocation0]]
  $region90: #{momvfcc_forward.1} parent=0
    _
  %s19 = ssub.s32 1, %s17
  %s20 = scalar_select 0, %s19, %s17
  $region1: #{momvfcc_forward.1} parent=0
    #allocation2 [shape = 'u8[8192]{0}', space=vmem, size = 0x2000, scoped, tag = 'output window, operand 0, single buffered']
    #allocation3 [shape = 's32[1]{0}', space=sflag, size = 0x4, scoped, tag = 'scoped memory for momvfcc_forward.1']
    #allocation4 [shape = 'u8[8192]{0}', space=vmem, size = 0x2000, scoped, tag = 'output window, operand 1, single buffered']
    #allocation5 [shape = 's32[1]{0}', space=sflag, size = 0x4, scoped, tag = 'scoped memory for momvfcc_forward.1']
    #allocation6 [shape = 'u8[8192]{0}', space=vmem, size = 0x2000, scoped, tag = 'output window, operand 2, single buffered']
    #allocation7 [shape = 'u8[8192]{0}', space=vmem, size = 0x2000, scoped, tag = 'output window, operand 3, single buffered']
    #allocation8 [shape = 's32[1]{0}', space=sflag, size = 0x4, scoped, tag = 'scoped memory for momvfcc_forward.1']
    #allocation9 [shape = 'u8[8192]{0}', space=vmem, size = 0x2000, scoped, tag = 'output window, operand 4, single buffered']
    %21 = vsyncpa [#allocation3], 0
    %22 = vsyncpa [#allocation5], 0
    %23 = vsyncpa [#allocation8], 0
    // Predicated region
    $region2: #{momvfcc_forward.1} parent=1 // pred_check
      _
    $region3: #{momvfcc_forward.1} parent=1 // pred_check_branch
      %25 = sbr.rel (0) target = $region5
    $region4: #{momvfcc_forward.1} parent=1 // pred_region
      _
    $region5: #{momvfcc_forward.1} parent=1 // pred_fallthru
      _
    // Predicated region
    $region6: #{momvfcc_forward.1} parent=1 // pred_check
      _
    $region7: #{momvfcc_forward.1} parent=1 // pred_check_branch
      %27 = sbr.rel (0) target = $region9
    $region8: #{momvfcc_forward.1} parent=1 // pred_region
      _
    $region9: #{momvfcc_forward.1} parent=1 // pred_fallthru
      _
    // Predicated region
    $region10: #{momvfcc_forward.1} parent=1 // pred_check
      _
    $region11: #{momvfcc_forward.1} parent=1 // pred_check_branch
      %29 = sbr.rel (0) target = $region13
    $region12: #{momvfcc_forward.1} parent=1 // pred_region
      _
    $region13: #{momvfcc_forward.1} parent=1 // pred_fallthru
      _
    // Predicated region
    $region14: #{momvfcc_forward.1} parent=1 // pred_check
      _
    $region15: #{momvfcc_forward.1} parent=1 // pred_check_branch
      %31 = sbr.rel (0) target = $region17
    $region16: #{momvfcc_forward.1} parent=1 // pred_region
      _
    $region17: #{momvfcc_forward.1} parent=1 // pred_fallthru
      _
    // Predicated region
    $region18: #{momvfcc_forward.1} parent=1 // pred_check
      _
    $region19: #{momvfcc_forward.1} parent=1 // pred_check_branch
      %33 = sbr.rel (0) target = $region21
    $region20: #{momvfcc_forward.1} parent=1 // pred_region
      _
    $region21: #{momvfcc_forward.1} parent=1 // pred_fallthru
      _
    // Predicated region
    $region22: #{momvfcc_forward.1} parent=1 // pred_check
      _
    $region23: #{momvfcc_forward.1} parent=1 // pred_check_branch
      %35 = sbr.rel (0) target = $region25
    $region24: #{momvfcc_forward.1} parent=1 // pred_region
      _
    $region25: #{momvfcc_forward.1} parent=1 // pred_fallthru
      _
    // Predicated region
    $region26: #{momvfcc_forward.1} parent=1 // pred_check
      _
    $region27: #{momvfcc_forward.1} parent=1 // pred_check_branch
      %37 = sbr.rel (0) target = $region29
    $region28: #{momvfcc_forward.1} parent=1 // pred_region
      _
    $region29: #{momvfcc_forward.1} parent=1 // pred_fallthru
      _
    // Predicated region
    $region30: #{momvfcc_forward.1} parent=1 // pred_check
      _
    $region31: #{momvfcc_forward.1} parent=1 // pred_check_branch
      %39 = sbr.rel (0) target = $region33
    $region32: #{momvfcc_forward.1} parent=1 // pred_region
      _
    $region33: #{momvfcc_forward.1} parent=1 // pred_fallthru
      _
    // Predicated region
    $region34: #{momvfcc_forward.1} parent=1 // pred_check
      _
    $region35: #{momvfcc_forward.1} parent=1 // pred_check_branch
      %41 = sbr.rel (0) target = $region37
    $region36: #{momvfcc_forward.1} parent=1 // pred_region
      _
    $region37: #{momvfcc_forward.1} parent=1 // pred_fallthru
      _
    // Predicated region
    $region38: #{momvfcc_forward.1} parent=1 // pred_check
      _
    $region39: #{momvfcc_forward.1} parent=1 // pred_check_branch
      %43 = sbr.rel (0) target = $region41
    $region40: #{momvfcc_forward.1} parent=1 // pred_region
      _
    $region41: #{momvfcc_forward.1} parent=1 // pred_fallthru
      _
    %v44 = vld [vmem:[%s8] sm:$0xff]
    %v45 = vld [vmem:[%s0] sm:$0xff]
    %v46 = vld [vmem:[%s0 + $0x8] sm:$0xff]
    %vm47 = vcmp.ne.f32.partialorder %v45, 0.0
    %vm48 = vcmp.ne.f32.partialorder %v46, 0.0
    %v49 = vld [vmem:[%s1] sm:$0xff]
    %v50 = vld [vmem:[%s1 + $0x8] sm:$0xff]
    %v51 = vld [vmem:[%s2] sm:$0xff]
    %v52 = vld [vmem:[%s2 + $0x8] sm:$0xff]
    %v53 = vld [vmem:[%s2 + $0x10] sm:$0xff]
    %v54 = vld [vmem:[%s2 + $0x18] sm:$0xff]
    %vm55 = vcmask 261120
    %v57 = vsel %vm55, %v49, 0
    %v60 = vsel %vm55, %v50, 0
    %62 = vmatpush.msra.mxu0 0.0
    %63 = vmatpush.msra.mxu0 0.0
    %64 = vmatpush.msra.mxu0 0.0
    %65 = vmatpush.msra.mxu0 0.0
    %66 = vmatpush.msra.mxu0 0.0
    %67 = vmatpush.msra.mxu0 0.0
    %68 = vmatpush.msra.mxu0 0.0
    %69 = vmatpush.msra.mxu0 0.0
    %70 = vmatpush.msra.mxu0 0.0
    %71 = vmatpush.msra.mxu0 0.0
    %72 = vmatpush.msra.mxu0 0.0
    %73 = vmatpush.msra.mxu0 0.0
    %74 = vmatpush.msra.mxu0 %v54
    %75 = vmatpush.msra.mxu0 %v53
    %76 = vmatpush.msra.mxu0 %v52
    %77 = vmatpush.msra.mxu0 %v51
    %78 = vmatmul.f32.gmra.mxu0 %v57
    %v79 = vpop.f32.mrf.mxu0
    %v80 = vadd.f32 0.0, %v79
    %81 = vmatmul.f32.gmra.mxu0 %v60
    %v82 = vpop.f32.mrf.mxu0
    %v83 = vadd.f32 0.0, %v82
    %84 = vdwg.mxu0
    %v85 = vperm.slane %v44, 0
    %v86 = vmul.f32 %v80, %v85
    %v87 = vmul.f32 %v83, %v85
    %vm88 = vcmask 523264
    %v89 = vsel %vm88, %v86, 0.0
    %90 = vadd.xlane.f32.xlu0 %v89
    %v91 = vpop.xlane.xlu0 %90
    %v92 = vsel %vm88, %v87, 0.0
    %93 = vadd.xlane.f32.xlu0 %v92
    %v94 = vpop.xlane.xlu0 %93
    %v96 = vrot.slane %v44, 1
    %v97 = vsel %vm88, %v96, 0
    %v100 = vsel %vm88, %v80, 0
    %v103 = vsel %vm88, %v83, 0
    %105 = vmatpush.xpose.msra.mxu0 0.0
    %106 = vmatpush.xpose.msra.mxu0 0.0
    %107 = vmatpush.xpose.msra.mxu0 0.0
    %108 = vmatpush.xpose.msra.mxu0 0.0
    %109 = vmatpush.xpose.msra.mxu0 0.0
    %110 = vmatpush.xpose.msra.mxu0 0.0
    %111 = vmatpush.xpose.msra.mxu0 0.0
    %112 = vmatpush.xpose.msra.mxu0 0.0
    %113 = vmatpush.xpose.msra.mxu0 0.0
    %114 = vmatpush.xpose.msra.mxu0 0.0
    %115 = vmatpush.xpose.msra.mxu0 0.0
    %116 = vmatpush.xpose.msra.mxu0 0.0
    %117 = vmatpush.xpose.msra.mxu0 0.0
    %118 = vmatpush.xpose.msra.mxu0 0.0
    %119 = vmatpush.xpose.msra.mxu0 %v103
    %120 = vmatpush.xpose.msra.mxu0 %v100
    %121 = vmatmul.f32.gmra.mxu0 %v97
    %v122 = vpop.f32.mrf.mxu0
    %v123 = vadd.f32 0.0, %v122
    %124 = vdwg.mxu0
    %v125 = vperm.slane %v123, 0
    %v126 = vadd.f32 %v91, %v125
    %v127 = vadd.f32 %v94, %v125
    %v128 = vmul.f32 %v45, %v126
    %v129 = vmul.f32 %v46, %v127
    %v130 = vxor.u32 %v128, 2147483648
    %v131 = vxor.u32 %v129, 2147483648
    %v132 = vmul.f32 %v130, 1.442695
    %v133 = vpow.pop %v132
    %v134 = vmul.f32 %v131, 1.442695
    %v135 = vpow.pop %v134
    %v136 = vadd.f32 %v133, 1.0
    %v137 = vadd.f32 %v135, 1.0
    %v138 = vrcp.pop %v136
    %v139 = vmul.f32 %v136, %v138
    %v140 = vsub.f32 1.0, %v139
    %v141 = vmul.f32 %v138, %v140
    %v142 = vadd.f32 %v138, %v141
    %vm143 = vweird.f32 %v136
    %vm144 = vweird.f32 %v138
    %vm145 = vmor %vm143, %vm144
    %v146 = vsel %vm145, %v138, %v142
    %v147 = vand.u32 2147483647, %v136
    %vm148 = vcmp.eq.f32.partialorder %v147, 8.507059e+37
    %v149 = vand.u32 %v136, 2147483648
    %v150 = vor.u32 1.1754944e-38, %v149
    %v151 = vsel %vm148, %v150, %v146
    %v152 = vmul.f32 1.0, %v151
    %v153 = vrcp.pop %v137
    %v154 = vmul.f32 %v137, %v153
    %v155 = vsub.f32 1.0, %v154
    %v156 = vmul.f32 %v153, %v155
    %v157 = vadd.f32 %v153, %v156
    %vm158 = vweird.f32 %v137
    %vm159 = vweird.f32 %v153
    %vm160 = vmor %vm158, %vm159
    %v161 = vsel %vm160, %v153, %v157
    %v162 = vand.u32 2147483647, %v137
    %vm163 = vcmp.eq.f32.partialorder %v162, 8.507059e+37
    %v164 = vand.u32 %v137, 2147483648
    %v165 = vor.u32 1.1754944e-38, %v164
    %v166 = vsel %vm163, %v165, %v161
    %v167 = vmul.f32 1.0, %v166
    %v168 = vmul.f32 %v152, 1.442695
    %v169 = vpow.pop %v168
    %v170 = vmul.f32 %v167, 1.442695
    %v171 = vpow.pop %v170
    %v172 = vsel %vm47, %v169, 0.0
    %v173 = vsel %vm48, %v171, 0.0
    %vm174 = vcmask 130048
    %v175 = vsel %vm174, %v172, 0.0
    %176 = vadd.xlane.f32.xlu0 %v175
    %v177 = vpop.xlane.xlu0 %176
    %v178 = vsel %vm174, %v173, 0.0
    %179 = vadd.xlane.f32.xlu0 %v178
    %v180 = vpop.xlane.xlu0 %179
    %vm181 = vcmp.gt.f32.partialorder %v177, 0.0
    %vm182 = vcmp.gt.f32.partialorder %v180, 0.0
    %v183 = vsel %vm181, %v177, 1.0
    %v184 = vsel %vm182, %v180, 1.0
    %v185 = vrcp.pop %v183
    %v186 = vrcp.pop %v184
    %v187 = vmul.f32 %v172, %v185
    %v188 = vmul.f32 %v173, %v186
    %v190 = vsel %vm174, %v187, 0
    %v193 = vsel %vm174, %v188, 0
    %195 = vmatpush.msra.mxu0 0.0
    %196 = vmatpush.msra.mxu0 0.0
    %197 = vmatpush.msra.mxu0 0.0
    %198 = vmatpush.msra.mxu0 0.0
    %199 = vmatpush.msra.mxu0 0.0
    %200 = vmatpush.msra.mxu0 0.0
    %201 = vmatpush.msra.mxu0 0.0
    %202 = vmatpush.msra.mxu0 0.0
    %203 = vmatpush.msra.mxu0 0.0
    %204 = vmatpush.msra.mxu0 0.0
    %205 = vmatpush.msra.mxu0 0.0
    %206 = vmatpush.msra.mxu0 0.0
    %207 = vmatpush.msra.mxu0 0.0
    %208 = vmatpush.msra.mxu0 0.0
    %209 = vmatpush.msra.mxu0 %v83
    %210 = vmatpush.msra.mxu0 %v80
    %211 = vmatmul.f32.gmra.mxu0 %v190
    %v212 = vpop.f32.mrf.mxu0
    %v213 = vadd.f32 0.0, %v212
    %214 = vmatmul.f32.gmra.mxu0 %v193
    %v215 = vpop.f32.mrf.mxu0
    %v216 = vadd.f32 0.0, %v215
    %217 = vdwg.mxu0
    %v218 = vld [vmem:[%s3] sm:$0xff]
    %v219 = vld [vmem:[%s3 + $0x8] sm:$0xff]
    %v220 = vld [vmem:[%s3 + $0x10] sm:$0xff]
    %v221 = vld [vmem:[%s3 + $0x18] sm:$0xff]
    %v222 = vld [vmem:[%s3 + $0x20] sm:$0xff]
    %v223 = vld [vmem:[%s3 + $0x28] sm:$0xff]
    %v224 = vld [vmem:[%s3 + $0x30] sm:$0xff]
    %v225 = vld [vmem:[%s3 + $0x38] sm:$0xff]
    %v227 = vsel %vm88, %v213, 0
    %v230 = vsel %vm88, %v216, 0
    %232 = vmatpush.msra.mxu0 0.0
    %233 = vmatpush.msra.mxu0 0.0
    %234 = vmatpush.msra.mxu0 0.0
    %235 = vmatpush.msra.mxu0 0.0
    %236 = vmatpush.msra.mxu0 0.0
    %237 = vmatpush.msra.mxu0 0.0
    %238 = vmatpush.msra.mxu0 0.0
    %239 = vmatpush.msra.mxu0 0.0
    %240 = vmatpush.msra.mxu0 %v225
    %241 = vmatpush.msra.mxu0 %v224
    %242 = vmatpush.msra.mxu0 %v223
    %243 = vmatpush.msra.mxu0 %v222
    %244 = vmatpush.msra.mxu0 %v221
    %245 = vmatpush.msra.mxu0 %v220
    %246 = vmatpush.msra.mxu0 %v219
    %247 = vmatpush.msra.mxu0 %v218
    %248 = vmatmul.f32.gmra.mxu0 %v227
    %v249 = vpop.f32.mrf.mxu0
    %v250 = vadd.f32 0.0, %v249
    %251 = vmatmul.f32.gmra.mxu0 %v230
    %v252 = vpop.f32.mrf.mxu0
    %v253 = vadd.f32 0.0, %v252
    %254 = vdwg.mxu0
    %v255 = vperm.slane %v44, 2
    %v256 = vmul.f32 %v250, %v255
    %v257 = vmul.f32 %v253, %v255
    %v258 = vsel %vm174, %v256, 0.0
    %259 = vadd.xlane.f32.xlu0 %v258
    %v260 = vpop.xlane.xlu0 %259
    %v261 = vsel %vm174, %v257, 0.0
    %262 = vadd.xlane.f32.xlu0 %v261
    %v263 = vpop.xlane.xlu0 %262
    %v264 = vrot.slane %v44, 3
    %v265 = vsel %vm174, %v264, 0
    %v268 = vsel %vm174, %v250, 0
    %v271 = vsel %vm174, %v253, 0
    %273 = vmatpush.xpose.msra.mxu0 0.0
    %274 = vmatpush.xpose.msra.mxu0 0.0
    %275 = vmatpush.xpose.msra.mxu0 0.0
    %276 = vmatpush.xpose.msra.mxu0 0.0
    %277 = vmatpush.xpose.msra.mxu0 0.0
    %278 = vmatpush.xpose.msra.mxu0 0.0
    %279 = vmatpush.xpose.msra.mxu0 0.0
    %280 = vmatpush.xpose.msra.mxu0 0.0
    %281 = vmatpush.xpose.msra.mxu0 0.0
    %282 = vmatpush.xpose.msra.mxu0 0.0
    %283 = vmatpush.xpose.msra.mxu0 0.0
    %284 = vmatpush.xpose.msra.mxu0 0.0
    %285 = vmatpush.xpose.msra.mxu0 0.0
    %286 = vmatpush.xpose.msra.mxu0 0.0
    %287 = vmatpush.xpose.msra.mxu0 %v271
    %288 = vmatpush.xpose.msra.mxu0 %v268
    %289 = vmatmul.f32.gmra.mxu0 %v265
    %v290 = vpop.f32.mrf.mxu0
    %v291 = vadd.f32 0.0, %v290
    %292 = vdwg.mxu0
    %v293 = vperm.slane %v291, 0
    %v294 = vadd.f32 %v260, %v293
    %v295 = vadd.f32 %v263, %v293
    %v296 = vmul.f32 %v45, %v294
    %v297 = vmul.f32 %v46, %v295
    %v298 = vxor.u32 %v296, 2147483648
    %v299 = vxor.u32 %v297, 2147483648
    %v300 = vmul.f32 %v298, 1.442695
    %v301 = vpow.pop %v300
    %v302 = vmul.f32 %v299, 1.442695
    %v303 = vpow.pop %v302
    %v304 = vadd.f32 %v301, 1.0
    %v305 = vadd.f32 %v303, 1.0
    %v306 = vrcp.pop %v304
    %v307 = vmul.f32 %v304, %v306
    %v308 = vsub.f32 1.0, %v307
    %v309 = vmul.f32 %v306, %v308
    %v310 = vadd.f32 %v306, %v309
    %vm311 = vweird.f32 %v304
    %vm312 = vweird.f32 %v306
    %vm313 = vmor %vm311, %vm312
    %v314 = vsel %vm313, %v306, %v310
    %v315 = vand.u32 2147483647, %v304
    %vm316 = vcmp.eq.f32.partialorder %v315, 8.507059e+37
    %v317 = vand.u32 %v304, 2147483648
    %v318 = vor.u32 1.1754944e-38, %v317
    %v319 = vsel %vm316, %v318, %v314
    %v320 = vmul.f32 1.0, %v319
    %v321 = vrcp.pop %v305
    %v322 = vmul.f32 %v305, %v321
    %v323 = vsub.f32 1.0, %v322
    %v324 = vmul.f32 %v321, %v323
    %v325 = vadd.f32 %v321, %v324
    %vm326 = vweird.f32 %v305
    %vm327 = vweird.f32 %v321
    %vm328 = vmor %vm326, %vm327
    %v329 = vsel %vm328, %v321, %v325
    %v330 = vand.u32 2147483647, %v305
    %vm331 = vcmp.eq.f32.partialorder %v330, 8.507059e+37
    %v332 = vand.u32 %v305, 2147483648
    %v333 = vor.u32 1.1754944e-38, %v332
    %v334 = vsel %vm331, %v333, %v329
    %v335 = vmul.f32 1.0, %v334
    %v336 = vmul.f32 %v320, 1.442695
    %v337 = vpow.pop %v336
    %v338 = vmul.f32 %v335, 1.442695
    %v339 = vpow.pop %v338
    %v340 = vsel %vm47, %v337, 0.0
    %v341 = vsel %vm48, %v339, 0.0
    %v342 = vsel %vm174, %v340, 0.0
    %343 = vadd.xlane.f32.xlu0 %v342
    %v344 = vpop.xlane.xlu0 %343
    %v345 = vsel %vm174, %v341, 0.0
    %346 = vadd.xlane.f32.xlu0 %v345
    %v347 = vpop.xlane.xlu0 %346
    %vm348 = vcmp.gt.f32.partialorder %v344, 0.0
    %vm349 = vcmp.gt.f32.partialorder %v347, 0.0
    %v350 = vsel %vm348, %v344, 1.0
    %v351 = vsel %vm349, %v347, 1.0
    %v352 = vrcp.pop %v350
    %v353 = vrcp.pop %v351
    %v354 = vmul.f32 %v340, %v352
    %v355 = vmul.f32 %v341, %v353
    %v357 = vsel %vm174, %v354, 0
    %v360 = vsel %vm174, %v355, 0
    %362 = vmatpush.msra.mxu0 0.0
    %363 = vmatpush.msra.mxu0 0.0
    %364 = vmatpush.msra.mxu0 0.0
    %365 = vmatpush.msra.mxu0 0.0
    %366 = vmatpush.msra.mxu0 0.0
    %367 = vmatpush.msra.mxu0 0.0
    %368 = vmatpush.msra.mxu0 0.0
    %369 = vmatpush.msra.mxu0 0.0
    %370 = vmatpush.msra.mxu0 0.0
    %371 = vmatpush.msra.mxu0 0.0
    %372 = vmatpush.msra.mxu0 0.0
    %373 = vmatpush.msra.mxu0 0.0
    %374 = vmatpush.msra.mxu0 0.0
    %375 = vmatpush.msra.mxu0 0.0
    %376 = vmatpush.msra.mxu0 %v253
    %377 = vmatpush.msra.mxu0 %v250
    %378 = vmatmul.f32.gmra.mxu0 %v357
    %v379 = vpop.f32.mrf.mxu0
    %v380 = vadd.f32 0.0, %v379
    %381 = vmatmul.f32.gmra.mxu0 %v360
    %v382 = vpop.f32.mrf.mxu0
    %v383 = vadd.f32 0.0, %v382
    %384 = vdwg.mxu0
    %v386 = vsel %vm174, %v380, 0
    %v389 = vsel %vm174, %v383, 0
    %v392 = vsel %vm174, %v218, 0
    %v395 = vsel %vm174, %v219, 0
    %v398 = vsel %vm174, %v220, 0
    %v401 = vsel %vm174, %v221, 0
    %v404 = vsel %vm174, %v222, 0
    %v407 = vsel %vm174, %v223, 0
    %v410 = vsel %vm174, %v224, 0
    %v413 = vsel %vm174, %v225, 0
    %415 = vmatpush.xpose.msra.mxu0 0.0
    %416 = vmatpush.xpose.msra.mxu0 0.0
    %417 = vmatpush.xpose.msra.mxu0 0.0
    %418 = vmatpush.xpose.msra.mxu0 0.0
    %419 = vmatpush.xpose.msra.mxu0 0.0
    %420 = vmatpush.xpose.msra.mxu0 0.0
    %421 = vmatpush.xpose.msra.mxu0 0.0
    %422 = vmatpush.xpose.msra.mxu0 0.0
    %423 = vmatpush.xpose.msra.mxu0 %v413
    %424 = vmatpush.xpose.msra.mxu0 %v410
    %425 = vmatpush.xpose.msra.mxu0 %v407
    %426 = vmatpush.xpose.msra.mxu0 %v404
    %427 = vmatpush.xpose.msra.mxu0 %v401
    %428 = vmatpush.xpose.msra.mxu0 %v398
    %429 = vmatpush.xpose.msra.mxu0 %v395
    %430 = vmatpush.xpose.msra.mxu0 %v392
    %431 = vmatmul.f32.gmra.mxu0 %v386
    %v432 = vpop.f32.mrf.mxu0
    %v433 = vadd.f32 0.0, %v432
    %434 = vmatmul.f32.gmra.mxu0 %v389
    %v435 = vpop.f32.mrf.mxu0
    %v436 = vadd.f32 0.0, %v435
    %437 = vdwg.mxu0
    %438 = vmatpush.msra.mxu0 0.0
    %439 = vmatpush.msra.mxu0 0.0
    %440 = vmatpush.msra.mxu0 0.0
    %441 = vmatpush.msra.mxu0 0.0
    %442 = vmatpush.msra.mxu0 0.0
    %443 = vmatpush.msra.mxu0 0.0
    %444 = vmatpush.msra.mxu0 0.0
    %445 = vmatpush.msra.mxu0 0.0
    %446 = vmatpush.msra.mxu0 0.0
    %447 = vmatpush.msra.mxu0 0.0
    %448 = vmatpush.msra.mxu0 0.0
    %449 = vmatpush.msra.mxu0 0.0
    %450 = vmatpush.msra.mxu0 0.0
    %451 = vmatpush.msra.mxu0 0.0
    %452 = vmatpush.msra.mxu0 %v436
    %453 = vmatpush.msra.mxu0 %v433
    %454 = vmatmul.f32.gmra.mxu0 %v357
    %v455 = vpop.f32.mrf.mxu0
    %v456 = vadd.f32 0.0, %v455
    %457 = vmatmul.f32.gmra.mxu0 %v360
    %v458 = vpop.f32.mrf.mxu0
    %v459 = vadd.f32 0.0, %v458
    %460 = vdwg.mxu0
    %v462 = vsel %vm88, %v456, 0
    %v465 = vsel %vm88, %v459, 0
    %v468 = vsel %vm88, %v51, 0
    %v471 = vsel %vm88, %v52, 0
    %v474 = vsel %vm88, %v53, 0
    %v477 = vsel %vm88, %v54, 0
    %479 = vmatpush.xpose.msra.mxu0 0.0
    %480 = vmatpush.xpose.msra.mxu0 0.0
    %481 = vmatpush.xpose.msra.mxu0 0.0
    %482 = vmatpush.xpose.msra.mxu0 0.0
    %483 = vmatpush.xpose.msra.mxu0 0.0
    %484 = vmatpush.xpose.msra.mxu0 0.0
    %485 = vmatpush.xpose.msra.mxu0 0.0
    %486 = vmatpush.xpose.msra.mxu0 0.0
    %487 = vmatpush.xpose.msra.mxu0 0.0
    %488 = vmatpush.xpose.msra.mxu0 0.0
    %489 = vmatpush.xpose.msra.mxu0 0.0
    %490 = vmatpush.xpose.msra.mxu0 0.0
    %491 = vmatpush.xpose.msra.mxu0 %v477
    %492 = vmatpush.xpose.msra.mxu0 %v474
    %493 = vmatpush.xpose.msra.mxu0 %v471
    %494 = vmatpush.xpose.msra.mxu0 %v468
    %495 = vmatmul.f32.gmra.mxu0 %v462
    %v496 = vpop.f32.mrf.mxu0
    %v497 = vadd.f32 0.0, %v496
    %498 = vmatmul.f32.gmra.mxu0 %v465
    %v499 = vpop.f32.mrf.mxu0
    %v500 = vadd.f32 0.0, %v499
    %501 = vdwg.mxu0
    %502 = vmatpush.msra.mxu0 0.0
    %503 = vmatpush.msra.mxu0 0.0
    %504 = vmatpush.msra.mxu0 0.0
    %505 = vmatpush.msra.mxu0 0.0
    %506 = vmatpush.msra.mxu0 0.0
    %507 = vmatpush.msra.mxu0 0.0
    %508 = vmatpush.msra.mxu0 0.0
    %509 = vmatpush.msra.mxu0 0.0
    %510 = vmatpush.msra.mxu0 0.0
    %511 = vmatpush.msra.mxu0 0.0
    %512 = vmatpush.msra.mxu0 0.0
    %513 = vmatpush.msra.mxu0 0.0
    %514 = vmatpush.msra.mxu0 0.0
    %515 = vmatpush.msra.mxu0 0.0
    %516 = vmatpush.msra.mxu0 %v500
    %517 = vmatpush.msra.mxu0 %v497
    %518 = vmatmul.f32.gmra.mxu0 %v190
    %v519 = vpop.f32.mrf.mxu0
    %v520 = vadd.f32 0.0, %v519
    %521 = vmatmul.f32.gmra.mxu0 %v193
    %v522 = vpop.f32.mrf.mxu0
    %v523 = vadd.f32 0.0, %v522
    %524 = vdwg.mxu0
    %v525 = vld [vmem:[%s4] sm:$0xff]
    %v526 = vld [vmem:[%s4 + $0x8] sm:$0xff]
    %vm527 = vcmp.ne.f32.partialorder %v525, 0.0
    %vm528 = vcmp.ne.f32.partialorder %v526, 0.0
    %v529 = vld [vmem:[%s5] sm:$0xff]
    %v530 = vld [vmem:[%s5 + $0x8] sm:$0xff]
    %v531 = vld [vmem:[%s6] sm:$0xff]
    %v532 = vld [vmem:[%s6 + $0x8] sm:$0xff]
    %v533 = vld [vmem:[%s6 + $0x10] sm:$0xff]
    %vm534 = vcmask 195584
    %v536 = vsel %vm534, %v529, 0
    %v539 = vsel %vm534, %v530, 0
    %541 = vmatpush.msra.mxu0 0.0
    %542 = vmatpush.msra.mxu0 0.0
    %543 = vmatpush.msra.mxu0 0.0
    %544 = vmatpush.msra.mxu0 0.0
    %545 = vmatpush.msra.mxu0 0.0
    %546 = vmatpush.msra.mxu0 0.0
    %547 = vmatpush.msra.mxu0 0.0
    %548 = vmatpush.msra.mxu0 0.0
    %549 = vmatpush.msra.mxu0 0.0
    %550 = vmatpush.msra.mxu0 0.0
    %551 = vmatpush.msra.mxu0 0.0
    %552 = vmatpush.msra.mxu0 0.0
    %553 = vmatpush.msra.mxu0 0.0
    %554 = vmatpush.msra.mxu0 %v533
    %555 = vmatpush.msra.mxu0 %v532
    %556 = vmatpush.msra.mxu0 %v531
    %557 = vmatmul.f32.gmra.mxu0 %v536
    %v558 = vpop.f32.mrf.mxu0
    %v559 = vadd.f32 0.0, %v558
    %560 = vmatmul.f32.gmra.mxu0 %v539
    %v561 = vpop.f32.mrf.mxu0
    %v562 = vadd.f32 0.0, %v561
    %563 = vdwg.mxu0
    %v564 = vperm.slane %v44, 4
    %v565 = vmul.f32 %v559, %v564
    %v566 = vmul.f32 %v562, %v564
    %vm567 = vcmask 392192
    %v568 = vsel %vm567, %v565, 0.0
    %569 = vadd.xlane.f32.xlu0 %v568
    %v570 = vpop.xlane.xlu0 %569
    %v571 = vsel %vm567, %v566, 0.0
    %572 = vadd.xlane.f32.xlu0 %v571
    %v573 = vpop.xlane.xlu0 %572
    %v574 = vrot.slane %v44, 5
    %v575 = vsel %vm567, %v574, 0
    %v578 = vsel %vm567, %v559, 0
    %v581 = vsel %vm567, %v562, 0
    %583 = vmatpush.xpose.msra.mxu0 0.0
    %584 = vmatpush.xpose.msra.mxu0 0.0
    %585 = vmatpush.xpose.msra.mxu0 0.0
    %586 = vmatpush.xpose.msra.mxu0 0.0
    %587 = vmatpush.xpose.msra.mxu0 0.0
    %588 = vmatpush.xpose.msra.mxu0 0.0
    %589 = vmatpush.xpose.msra.mxu0 0.0
    %590 = vmatpush.xpose.msra.mxu0 0.0
    %591 = vmatpush.xpose.msra.mxu0 0.0
    %592 = vmatpush.xpose.msra.mxu0 0.0
    %593 = vmatpush.xpose.msra.mxu0 0.0
    %594 = vmatpush.xpose.msra.mxu0 0.0
    %595 = vmatpush.xpose.msra.mxu0 0.0
    %596 = vmatpush.xpose.msra.mxu0 0.0
    %597 = vmatpush.xpose.msra.mxu0 %v581
    %598 = vmatpush.xpose.msra.mxu0 %v578
    %599 = vmatmul.f32.gmra.mxu0 %v575
    %v600 = vpop.f32.mrf.mxu0
    %v601 = vadd.f32 0.0, %v600
    %602 = vdwg.mxu0
    %v603 = vperm.slane %v601, 0
    %v604 = vadd.f32 %v570, %v603
    %v605 = vadd.f32 %v573, %v603
    %v606 = vmul.f32 %v525, %v604
    %v607 = vmul.f32 %v526, %v605
    %v608 = vxor.u32 %v606, 2147483648
    %v609 = vxor.u32 %v607, 2147483648
    %v610 = vmul.f32 %v608, 1.442695
    %v611 = vpow.pop %v610
    %v612 = vmul.f32 %v609, 1.442695
    %v613 = vpow.pop %v612
    %v614 = vadd.f32 %v611, 1.0
    %v615 = vadd.f32 %v613, 1.0
    %v616 = vrcp.pop %v614
    %v617 = vmul.f32 %v614, %v616
    %v618 = vsub.f32 1.0, %v617
    %v619 = vmul.f32 %v616, %v618
    %v620 = vadd.f32 %v616, %v619
    %vm621 = vweird.f32 %v614
    %vm622 = vweird.f32 %v616
    %vm623 = vmor %vm621, %vm622
    %v624 = vsel %vm623, %v616, %v620
    %v625 = vand.u32 2147483647, %v614
    %vm626 = vcmp.eq.f32.partialorder %v625, 8.507059e+37
    %v627 = vand.u32 %v614, 2147483648
    %v628 = vor.u32 1.1754944e-38, %v627
    %v629 = vsel %vm626, %v628, %v624
    %v630 = vmul.f32 1.0, %v629
    %v631 = vrcp.pop %v615
    %v632 = vmul.f32 %v615, %v631
    %v633 = vsub.f32 1.0, %v632
    %v634 = vmul.f32 %v631, %v633
    %v635 = vadd.f32 %v631, %v634
    %vm636 = vweird.f32 %v615
    %vm637 = vweird.f32 %v631
    %vm638 = vmor %vm636, %vm637
    %v639 = vsel %vm638, %v631, %v635
    %v640 = vand.u32 2147483647, %v615
    %vm641 = vcmp.eq.f32.partialorder %v640, 8.507059e+37
    %v642 = vand.u32 %v615, 2147483648
    %v643 = vor.u32 1.1754944e-38, %v642
    %v644 = vsel %vm641, %v643, %v639
    %v645 = vmul.f32 1.0, %v644
    %v646 = vmul.f32 %v630, 1.442695
    %v647 = vpow.pop %v646
    %v648 = vmul.f32 %v645, 1.442695
    %v649 = vpow.pop %v648
    %v650 = vsel %vm527, %v647, 0.0
    %v651 = vsel %vm528, %v649, 0.0
    %v652 = vsel %vm174, %v650, 0.0
    %653 = vadd.xlane.f32.xlu0 %v652
    %v654 = vpop.xlane.xlu0 %653
    %v655 = vsel %vm174, %v651, 0.0
    %656 = vadd.xlane.f32.xlu0 %v655
    %v657 = vpop.xlane.xlu0 %656
    %vm658 = vcmp.gt.f32.partialorder %v654, 0.0
    %vm659 = vcmp.gt.f32.partialorder %v657, 0.0
    %v660 = vsel %vm658, %v654, 1.0
    %v661 = vsel %vm659, %v657, 1.0
    %v662 = vrcp.pop %v660
    %v663 = vrcp.pop %v661
    %v664 = vmul.f32 %v650, %v662
    %v665 = vmul.f32 %v651, %v663
    %v667 = vsel %vm174, %v664, 0
    %v670 = vsel %vm174, %v665, 0
    %672 = vmatpush.msra.mxu0 0.0
    %673 = vmatpush.msra.mxu0 0.0
    %674 = vmatpush.msra.mxu0 0.0
    %675 = vmatpush.msra.mxu0 0.0
    %676 = vmatpush.msra.mxu0 0.0
    %677 = vmatpush.msra.mxu0 0.0
    %678 = vmatpush.msra.mxu0 0.0
    %679 = vmatpush.msra.mxu0 0.0
    %680 = vmatpush.msra.mxu0 0.0
    %681 = vmatpush.msra.mxu0 0.0
    %682 = vmatpush.msra.mxu0 0.0
    %683 = vmatpush.msra.mxu0 0.0
    %684 = vmatpush.msra.mxu0 0.0
    %685 = vmatpush.msra.mxu0 0.0
    %686 = vmatpush.msra.mxu0 %v562
    %687 = vmatpush.msra.mxu0 %v559
    %688 = vmatmul.f32.gmra.mxu0 %v667
    %v689 = vpop.f32.mrf.mxu0
    %v690 = vadd.f32 0.0, %v689
    %691 = vmatmul.f32.gmra.mxu0 %v670
    %v692 = vpop.f32.mrf.mxu0
    %v693 = vadd.f32 0.0, %v692
    %694 = vdwg.mxu0
    %v695 = vld [vmem:[%s7] sm:$0xff]
    %v696 = vld [vmem:[%s7 + $0x8] sm:$0xff]
    %v697 = vld [vmem:[%s7 + $0x10] sm:$0xff]
    %v698 = vld [vmem:[%s7 + $0x18] sm:$0xff]
    %v699 = vld [vmem:[%s7 + $0x20] sm:$0xff]
    %v700 = vld [vmem:[%s7 + $0x28] sm:$0xff]
    %v702 = vsel %vm567, %v690, 0
    %v705 = vsel %vm567, %v693, 0
    %707 = vmatpush.msra.mxu0 0.0
    %708 = vmatpush.msra.mxu0 0.0
    %709 = vmatpush.msra.mxu0 0.0
    %710 = vmatpush.msra.mxu0 0.0
    %711 = vmatpush.msra.mxu0 0.0
    %712 = vmatpush.msra.mxu0 0.0
    %713 = vmatpush.msra.mxu0 0.0
    %714 = vmatpush.msra.mxu0 0.0
    %715 = vmatpush.msra.mxu0 0.0
    %716 = vmatpush.msra.mxu0 0.0
    %717 = vmatpush.msra.mxu0 %v700
    %718 = vmatpush.msra.mxu0 %v699
    %719 = vmatpush.msra.mxu0 %v698
    %720 = vmatpush.msra.mxu0 %v697
    %721 = vmatpush.msra.mxu0 %v696
    %722 = vmatpush.msra.mxu0 %v695
    %723 = vmatmul.f32.gmra.mxu0 %v702
    %v724 = vpop.f32.mrf.mxu0
    %v725 = vadd.f32 0.0, %v724
    %726 = vmatmul.f32.gmra.mxu0 %v705
    %v727 = vpop.f32.mrf.mxu0
    %v728 = vadd.f32 0.0, %v727
    %729 = vdwg.mxu0
    %v730 = vperm.slane %v44, 6
    %v731 = vmul.f32 %v725, %v730
    %v732 = vmul.f32 %v728, %v730
    %v733 = vsel %vm174, %v731, 0.0
    %734 = vadd.xlane.f32.xlu0 %v733
    %v735 = vpop.xlane.xlu0 %734
    %v736 = vsel %vm174, %v732, 0.0
    %737 = vadd.xlane.f32.xlu0 %v736
    %v738 = vpop.xlane.xlu0 %737
    %v739 = vrot.slane %v44, 7
    %v740 = vsel %vm174, %v739, 0
    %v743 = vsel %vm174, %v725, 0
    %v746 = vsel %vm174, %v728, 0
    %748 = vmatpush.xpose.msra.mxu0 0.0
    %749 = vmatpush.xpose.msra.mxu0 0.0
    %750 = vmatpush.xpose.msra.mxu0 0.0
    %751 = vmatpush.xpose.msra.mxu0 0.0
    %752 = vmatpush.xpose.msra.mxu0 0.0
    %753 = vmatpush.xpose.msra.mxu0 0.0
    %754 = vmatpush.xpose.msra.mxu0 0.0
    %755 = vmatpush.xpose.msra.mxu0 0.0
    %756 = vmatpush.xpose.msra.mxu0 0.0
    %757 = vmatpush.xpose.msra.mxu0 0.0
    %758 = vmatpush.xpose.msra.mxu0 0.0
    %759 = vmatpush.xpose.msra.mxu0 0.0
    %760 = vmatpush.xpose.msra.mxu0 0.0
    %761 = vmatpush.xpose.msra.mxu0 0.0
    %762 = vmatpush.xpose.msra.mxu0 %v746
    %763 = vmatpush.xpose.msra.mxu0 %v743
    %764 = vmatmul.f32.gmra.mxu0 %v740
    %v765 = vpop.f32.mrf.mxu0
    %v766 = vadd.f32 0.0, %v765
    %767 = vdwg.mxu0
    %v768 = vperm.slane %v766, 0
    %v769 = vadd.f32 %v735, %v768
    %v770 = vadd.f32 %v738, %v768
    %v771 = vmul.f32 %v525, %v769
    %v772 = vmul.f32 %v526, %v770
    %v773 = vxor.u32 %v771, 2147483648
    %v774 = vxor.u32 %v772, 2147483648
    %v775 = vmul.f32 %v773, 1.442695
    %v776 = vpow.pop %v775
    %v777 = vmul.f32 %v774, 1.442695
    %v778 = vpow.pop %v777
    %v779 = vadd.f32 %v776, 1.0
    %v780 = vadd.f32 %v778, 1.0
    %v781 = vrcp.pop %v779
    %v782 = vmul.f32 %v779, %v781
    %v783 = vsub.f32 1.0, %v782
    %v784 = vmul.f32 %v781, %v783
    %v785 = vadd.f32 %v781, %v784
    %vm786 = vweird.f32 %v779
    %vm787 = vweird.f32 %v781
    %vm788 = vmor %vm786, %vm787
    %v789 = vsel %vm788, %v781, %v785
    %v790 = vand.u32 2147483647, %v779
    %vm791 = vcmp.eq.f32.partialorder %v790, 8.507059e+37
    %v792 = vand.u32 %v779, 2147483648
    %v793 = vor.u32 1.1754944e-38, %v792
    %v794 = vsel %vm791, %v793, %v789
    %v795 = vmul.f32 1.0, %v794
    %v796 = vrcp.pop %v780
    %v797 = vmul.f32 %v780, %v796
    %v798 = vsub.f32 1.0, %v797
    %v799 = vmul.f32 %v796, %v798
    %v800 = vadd.f32 %v796, %v799
    %vm801 = vweird.f32 %v780
    %vm802 = vweird.f32 %v796
    %vm803 = vmor %vm801, %vm802
    %v804 = vsel %vm803, %v796, %v800
    %v805 = vand.u32 2147483647, %v780
    %vm806 = vcmp.eq.f32.partialorder %v805, 8.507059e+37
    %v807 = vand.u32 %v780, 2147483648
    %v808 = vor.u32 1.1754944e-38, %v807
    %v809 = vsel %vm806, %v808, %v804
    %v810 = vmul.f32 1.0, %v809
    %v811 = vmul.f32 %v795, 1.442695
    %v812 = vpow.pop %v811
    %v813 = vmul.f32 %v810, 1.442695
    %v814 = vpow.pop %v813
    %v815 = vsel %vm527, %v812, 0.0
    %v816 = vsel %vm528, %v814, 0.0
    %v817 = vsel %vm174, %v815, 0.0
    %818 = vadd.xlane.f32.xlu0 %v817
    %v819 = vpop.xlane.xlu0 %818
    %v820 = vsel %vm174, %v816, 0.0
    %821 = vadd.xlane.f32.xlu0 %v820
    %v822 = vpop.xlane.xlu0 %821
    %vm823 = vcmp.gt.f32.partialorder %v819, 0.0
    %vm824 = vcmp.gt.f32.partialorder %v822, 0.0
    %v825 = vsel %vm823, %v819, 1.0
    %v826 = vsel %vm824, %v822, 1.0
    %v827 = vrcp.pop %v825
    %v828 = vrcp.pop %v826
    %v829 = vmul.f32 %v815, %v827
    %v830 = vmul.f32 %v816, %v828
    %v832 = vsel %vm174, %v829, 0
    %v835 = vsel %vm174, %v830, 0
    %837 = vmatpush.msra.mxu0 0.0
    %838 = vmatpush.msra.mxu0 0.0
    %839 = vmatpush.msra.mxu0 0.0
    %840 = vmatpush.msra.mxu0 0.0
    %841 = vmatpush.msra.mxu0 0.0
    %842 = vmatpush.msra.mxu0 0.0
    %843 = vmatpush.msra.mxu0 0.0
    %844 = vmatpush.msra.mxu0 0.0
    %845 = vmatpush.msra.mxu0 0.0
    %846 = vmatpush.msra.mxu0 0.0
    %847 = vmatpush.msra.mxu0 0.0
    %848 = vmatpush.msra.mxu0 0.0
    %849 = vmatpush.msra.mxu0 0.0
    %850 = vmatpush.msra.mxu0 0.0
    %851 = vmatpush.msra.mxu0 %v728
    %852 = vmatpush.msra.mxu0 %v725
    %853 = vmatmul.f32.gmra.mxu0 %v832
    %v854 = vpop.f32.mrf.mxu0
    %v855 = vadd.f32 0.0, %v854
    %856 = vmatmul.f32.gmra.mxu0 %v835
    %v857 = vpop.f32.mrf.mxu0
    %v858 = vadd.f32 0.0, %v857
    %859 = vdwg.mxu0
    %v861 = vsel %vm174, %v855, 0
    %v864 = vsel %vm174, %v858, 0
    %v867 = vsel %vm174, %v695, 0
    %v870 = vsel %vm174, %v696, 0
    %v873 = vsel %vm174, %v697, 0
    %v876 = vsel %vm174, %v698, 0
    %v879 = vsel %vm174, %v699, 0
    %v882 = vsel %vm174, %v700, 0
    %884 = vmatpush.xpose.msra.mxu0 0.0
    %885 = vmatpush.xpose.msra.mxu0 0.0
    %886 = vmatpush.xpose.msra.mxu0 0.0
    %887 = vmatpush.xpose.msra.mxu0 0.0
    %888 = vmatpush.xpose.msra.mxu0 0.0
    %889 = vmatpush.xpose.msra.mxu0 0.0
    %890 = vmatpush.xpose.msra.mxu0 0.0
    %891 = vmatpush.xpose.msra.mxu0 0.0
    %892 = vmatpush.xpose.msra.mxu0 0.0
    %893 = vmatpush.xpose.msra.mxu0 0.0
    %894 = vmatpush.xpose.msra.mxu0 %v882
    %895 = vmatpush.xpose.msra.mxu0 %v879
    %896 = vmatpush.xpose.msra.mxu0 %v876
    %897 = vmatpush.xpose.msra.mxu0 %v873
    %898 = vmatpush.xpose.msra.mxu0 %v870
    %899 = vmatpush.xpose.msra.mxu0 %v867
    %900 = vmatmul.f32.gmra.mxu0 %v861
    %v901 = vpop.f32.mrf.mxu0
    %v902 = vadd.f32 0.0, %v901
    %903 = vmatmul.f32.gmra.mxu0 %v864
    %v904 = vpop.f32.mrf.mxu0
    %v905 = vadd.f32 0.0, %v904
    %906 = vdwg.mxu0
    %907 = vmatpush.msra.mxu0 0.0
    %908 = vmatpush.msra.mxu0 0.0
    %909 = vmatpush.msra.mxu0 0.0
    %910 = vmatpush.msra.mxu0 0.0
    %911 = vmatpush.msra.mxu0 0.0
    %912 = vmatpush.msra.mxu0 0.0
    %913 = vmatpush.msra.mxu0 0.0
    %914 = vmatpush.msra.mxu0 0.0
    %915 = vmatpush.msra.mxu0 0.0
    %916 = vmatpush.msra.mxu0 0.0
    %917 = vmatpush.msra.mxu0 0.0
    %918 = vmatpush.msra.mxu0 0.0
    %919 = vmatpush.msra.mxu0 0.0
    %920 = vmatpush.msra.mxu0 0.0
    %921 = vmatpush.msra.mxu0 %v905
    %922 = vmatpush.msra.mxu0 %v902
    %923 = vmatmul.f32.gmra.mxu0 %v832
    %v924 = vpop.f32.mrf.mxu0
    %v925 = vadd.f32 0.0, %v924
    %926 = vmatmul.f32.gmra.mxu0 %v835
    %v927 = vpop.f32.mrf.mxu0
    %v928 = vadd.f32 0.0, %v927
    %929 = vdwg.mxu0
    %v931 = vsel %vm567, %v925, 0
    %v934 = vsel %vm567, %v928, 0
    %v937 = vsel %vm567, %v531, 0
    %v940 = vsel %vm567, %v532, 0
    %v943 = vsel %vm567, %v533, 0
    %945 = vmatpush.xpose.msra.mxu0 0.0
    %946 = vmatpush.xpose.msra.mxu0 0.0
    %947 = vmatpush.xpose.msra.mxu0 0.0
    %948 = vmatpush.xpose.msra.mxu0 0.0
    %949 = vmatpush.xpose.msra.mxu0 0.0
    %950 = vmatpush.xpose.msra.mxu0 0.0
    %951 = vmatpush.xpose.msra.mxu0 0.0
    %952 = vmatpush.xpose.msra.mxu0 0.0
    %953 = vmatpush.xpose.msra.mxu0 0.0
    %954 = vmatpush.xpose.msra.mxu0 0.0
    %955 = vmatpush.xpose.msra.mxu0 0.0
    %956 = vmatpush.xpose.msra.mxu0 0.0
    %957 = vmatpush.xpose.msra.mxu0 0.0
    %958 = vmatpush.xpose.msra.mxu0 %v943
    %959 = vmatpush.xpose.msra.mxu0 %v940
    %960 = vmatpush.xpose.msra.mxu0 %v937
    %961 = vmatmul.f32.gmra.mxu0 %v931
    %v962 = vpop.f32.mrf.mxu0
    %v963 = vadd.f32 0.0, %v962
    %964 = vmatmul.f32.gmra.mxu0 %v934
    %v965 = vpop.f32.mrf.mxu0
    %v966 = vadd.f32 0.0, %v965
    %967 = vdwg.mxu0
    %968 = vmatpush.msra.mxu0 0.0
    %969 = vmatpush.msra.mxu0 0.0
    %970 = vmatpush.msra.mxu0 0.0
    %971 = vmatpush.msra.mxu0 0.0
    %972 = vmatpush.msra.mxu0 0.0
    %973 = vmatpush.msra.mxu0 0.0
    %974 = vmatpush.msra.mxu0 0.0
    %975 = vmatpush.msra.mxu0 0.0
    %976 = vmatpush.msra.mxu0 0.0
    %977 = vmatpush.msra.mxu0 0.0
    %978 = vmatpush.msra.mxu0 0.0
    %979 = vmatpush.msra.mxu0 0.0
    %980 = vmatpush.msra.mxu0 0.0
    %981 = vmatpush.msra.mxu0 0.0
    %982 = vmatpush.msra.mxu0 %v966
    %983 = vmatpush.msra.mxu0 %v963
    %984 = vmatmul.f32.gmra.mxu0 %v667
    %v985 = vpop.f32.mrf.mxu0
    %v986 = vadd.f32 0.0, %v985
    %987 = vmatmul.f32.gmra.mxu0 %v670
    %v988 = vpop.f32.mrf.mxu0
    %v989 = vadd.f32 0.0, %v988
    %990 = vdwg.mxu0
    %991 = vst.msk [vmem:[#allocation2] sm:$0xff] %vm174, %v380
    %992 = vst.msk [vmem:[#allocation2 + $0x8] sm:$0xff] %vm174, %v383
    %993 = vst.msk [vmem:[#allocation4] sm:$0xff] %vm174, %v855
    %994 = vst.msk [vmem:[#allocation4 + $0x8] sm:$0xff] %vm174, %v858
    %995 = vst.msk [vmem:[#allocation6] sm:$0xff] %vm55, %v520
    %996 = vst.msk [vmem:[#allocation6 + $0x8] sm:$0xff] %vm55, %v523
    %997 = vst.msk [vmem:[#allocation7] sm:$0xff] %vm534, %v986
    %998 = vst.msk [vmem:[#allocation7 + $0x8] sm:$0xff] %vm534, %v989
    %v999 = vmul.f32 %v855, 0.5
    %v1000 = vmul.f32 %v858, 0.5
    %v1001 = vadd.f32 %v380, %v999
    %v1002 = vadd.f32 %v383, %v1000
    %1003 = vst.msk [vmem:[#allocation9] sm:$0xff] %vm174, %v1001
    %1004 = vst.msk [vmem:[#allocation9 + $0x8] sm:$0xff] %vm174, %v1002
    %v1005 = vld [vmem:[%s9] sm:$0xff]
    %v1006 = vld [vmem:[%s9 + $0x8] sm:$0xff]
    %v1007 = vmul.f32 %v1001, %v1001
    %v1008 = vmul.f32 %v1002, %v1002
    %v1009 = vsel %vm174, %v1007, 0.0
    %1010 = vadd.xlane.f32.xlu0 %v1009
    %v1011 = vpop.xlane.xlu0 %1010
    %v1012 = vsel %vm174, %v1008, 0.0
    %1013 = vadd.xlane.f32.xlu0 %v1012
    %v1014 = vpop.xlane.xlu0 %1013
    %v1015 = vmul.f32 %v1005, %v1005
    %v1016 = vmul.f32 %v1006, %v1006
    %vm1017 = vcmask 31744
    %v1018 = vsel %vm1017, %v1015, 0.0
    %v1019 = vsel %vm1017, %v1016, 0.0
    %v1020 = vadd.f32 %v1018, %v1019
    %v1021 = vrot.slane %v1020, 4
    %v1022 = vadd.f32 %v1020, %v1021
    %v1023 = vrot.slane %v1022, 2
    %v1024 = vadd.f32 %v1022, %v1023
    %v1025 = vrot.slane %v1024, 1
    %v1026 = vadd.f32 %v1024, %v1025
    %v1028 = vsel %vm174, %v1001, 0
    %v1031 = vsel %vm174, %v1002, 0
    %1033 = vmatpush.msra.mxu0 0.0
    %1034 = vmatpush.msra.mxu0 0.0
    %1035 = vmatpush.msra.mxu0 0.0
    %1036 = vmatpush.msra.mxu0 0.0
    %1037 = vmatpush.msra.mxu0 0.0
    %1038 = vmatpush.msra.mxu0 0.0
    %1039 = vmatpush.msra.mxu0 0.0
    %1040 = vmatpush.msra.mxu0 0.0
    %1041 = vmatpush.msra.mxu0 0.0
    %1042 = vmatpush.msra.mxu0 0.0
    %1043 = vmatpush.msra.mxu0 0.0
    %1044 = vmatpush.msra.mxu0 0.0
    %1045 = vmatpush.msra.mxu0 0.0
    %1046 = vmatpush.msra.mxu0 0.0
    %1047 = vmatpush.msra.mxu0 %v1006
    %1048 = vmatpush.msra.mxu0 %v1005
    %1049 = vmatmul.f32.gmra.mxu0 %v1028
    %v1050 = vpop.f32.mrf.mxu0
    %v1051 = vadd.f32 0.0, %v1050
    %1052 = vmatmul.f32.gmra.mxu0 %v1031
    %v1053 = vpop.f32.mrf.mxu0
    %v1054 = vadd.f32 0.0, %v1053
    %1055 = vdwg.mxu0
    %v1056 = vadd.f32 %v1011, %v1026
    %v1057 = vadd.f32 %v1014, %v1026
    %v1058 = vmul.f32 %v1051, 2.0
    %v1059 = vmul.f32 %v1054, 2.0
    %v1060 = vsub.f32 %v1056, %v1058
    %v1061 = vsub.f32 %v1057, %v1059
    %v1062 = vmax.f32 %v1060, 0.0
    %v1063 = vmax.f32 %v1061, 0.0
    %v1064 = vmul.f32 %v1062, 0.5
    %v1065 = vmul.f32 %v1063, 0.5
    %v1066 = vadd.f32 %v1064, 1.0
    %v1067 = vadd.f32 %v1065, 1.0
    %v1068 = vrcp.pop %v1066
    %v1069 = vrcp.pop %v1067
    %v1070 = vrsqrt.pop %v1068
    %v1071 = vmul.f32 %v1070, %v1068
    %v1072 = vmul.f32 %v1071, %v1070
    %v1073 = vmul.f32 0.5, %v1072
    %v1074 = vsub.f32 1.5, %v1073
    %v1075 = vmul.f32 %v1070, %v1074
    %v1076 = vmul.f32 %v1068, %v1075
    %vm1077 = vcmp.eq.f32.partialorder %v1068, inf
    %v1078 = vsel %vm1077, %v1068, %v1076
    %vm1079 = vcmp.eq.f32.partialorder %v1068, 0.0
    %v1080 = vand.u32 %v1068, 2147483648
    %v1081 = vsel %vm1079, %v1080, %v1078
    %v1082 = vrsqrt.pop %v1069
    %v1083 = vmul.f32 %v1082, %v1069
    %v1084 = vmul.f32 %v1083, %v1082
    %v1085 = vmul.f32 0.5, %v1084
    %v1086 = vsub.f32 1.5, %v1085
    %v1087 = vmul.f32 %v1082, %v1086
    %v1088 = vmul.f32 %v1069, %v1087
    %vm1089 = vcmp.eq.f32.partialorder %v1069, inf
    %v1090 = vsel %vm1089, %v1069, %v1088
    %vm1091 = vcmp.eq.f32.partialorder %v1069, 0.0
    %v1092 = vand.u32 %v1069, 2147483648
    %v1093 = vsel %vm1091, %v1092, %v1090
    %v1094 = vmul.f32 %v1068, %v1081
    %v1095 = vmul.f32 %v1069, %v1093
    %v1096 = vsel %vm1017, %v1094, 0.0
    %1097 = vadd.xlane.f32.xlu0 %v1096
    %v1098 = vpop.xlane.xlu0 %1097
    %v1099 = vsel %vm1017, %v1095, 0.0
    %1100 = vadd.xlane.f32.xlu0 %v1099
    %v1101 = vpop.xlane.xlu0 %1100
    %v1102 = vrcp.pop %v1098
    %v1103 = vrcp.pop %v1101
    %v1104 = vmul.f32 %v1094, %v1102
    %v1105 = vmul.f32 %v1095, %v1103
    %1106 = vst.msk [vmem:[%s15] sm:$0xff] %vm1017, %v1104
    %1107 = vst.msk [vmem:[%s15 + $0x8] sm:$0xff] %vm1017, %v1105
    // Predicated region
    $region42: #{momvfcc_forward.1} parent=1 // pred_check
      _
    $region43: #{momvfcc_forward.1} parent=1 // pred_check_branch
      %1109 = sbr.rel (0) target = $region45
    $region44: #{momvfcc_forward.1} parent=1 // pred_region
      %1111 = vsyncadd [#allocation3], 0
      %s1112 = sshll.u32 [#allocation2], 4
      %s1113 = int_to_ptr.vmem [resolvable:$true] %s1112
      %s1114 = sshll.u32 %s10, 4
      %s1115 = int_to_ptr.hbm [resolvable:$true] %s1114
      %1120 = dma.vmem_to_hbm [thread:$0]  %s1113, 256, %s1115, [#allocation3], 128, 128, 8
    $region45: #{momvfcc_forward.1} parent=1 // pred_fallthru
      _
    // Predicated region
    $region46: #{momvfcc_forward.1} parent=1 // pred_check
      _
    $region47: #{momvfcc_forward.1} parent=1 // pred_check_branch
      %1122 = sbr.rel (0) target = $region49
    $region48: #{momvfcc_forward.1} parent=1 // pred_region
      %1124 = vsyncadd [#allocation5], 0
      %s1125 = sshll.u32 [#allocation4], 4
      %s1126 = int_to_ptr.vmem [resolvable:$true] %s1125
      %s1127 = sshll.u32 %s11, 4
      %s1128 = int_to_ptr.hbm [resolvable:$true] %s1127
      %1133 = dma.vmem_to_hbm [thread:$0]  %s1126, 256, %s1128, [#allocation5], 128, 128, 8
    $region49: #{momvfcc_forward.1} parent=1 // pred_fallthru
      _
    // Predicated region
    $region50: #{momvfcc_forward.1} parent=1 // pred_check
      _
    $region51: #{momvfcc_forward.1} parent=1 // pred_check_branch
      %1135 = sbr.rel (0) target = $region53
    $region52: #{momvfcc_forward.1} parent=1 // pred_region
      %1137 = vsyncadd [#allocation5], 0
      %s1138 = sshll.u32 [#allocation6], 4
      %s1139 = int_to_ptr.vmem [resolvable:$true] %s1138
      %s1140 = sshll.u32 %s12, 4
      %s1141 = int_to_ptr.hbm [resolvable:$true] %s1140
      %1146 = dma.vmem_to_hbm [thread:$0]  %s1139, 256, %s1141, [#allocation5], 128, 128, 8
    $region53: #{momvfcc_forward.1} parent=1 // pred_fallthru
      _
    // Predicated region
    $region54: #{momvfcc_forward.1} parent=1 // pred_check
      _
    $region55: #{momvfcc_forward.1} parent=1 // pred_check_branch
      %1148 = sbr.rel (0) target = $region57
    $region56: #{momvfcc_forward.1} parent=1 // pred_region
      %1150 = vsyncadd [#allocation8], 0
      %s1151 = sshll.u32 [#allocation7], 4
      %s1152 = int_to_ptr.vmem [resolvable:$true] %s1151
      %s1153 = sshll.u32 %s13, 4
      %s1154 = int_to_ptr.hbm [resolvable:$true] %s1153
      %1159 = dma.vmem_to_hbm [thread:$0]  %s1152, 256, %s1154, [#allocation8], 128, 128, 8
    $region57: #{momvfcc_forward.1} parent=1 // pred_fallthru
      _
    // Predicated region
    $region58: #{momvfcc_forward.1} parent=1 // pred_check
      _
    $region59: #{momvfcc_forward.1} parent=1 // pred_check_branch
      %1161 = sbr.rel (0) target = $region61
    $region60: #{momvfcc_forward.1} parent=1 // pred_region
      %1163 = vsyncadd [#allocation8], 0
      %s1164 = sshll.u32 [#allocation9], 4
      %s1165 = int_to_ptr.vmem [resolvable:$true] %s1164
      %s1166 = sshll.u32 %s14, 4
      %s1167 = int_to_ptr.hbm [resolvable:$true] %s1166
      %1172 = dma.vmem_to_hbm [thread:$0]  %s1165, 256, %s1167, [#allocation8], 128, 128, 8
    $region61: #{momvfcc_forward.1} parent=1 // pred_fallthru
      _
    // Predicated region
    $region62: #{momvfcc_forward.1} parent=1 // pred_check
      _
    $region63: #{momvfcc_forward.1} parent=1 // pred_check_branch
      %1174 = sbr.rel (0) target = $region65
    $region64: #{momvfcc_forward.1} parent=1 // pred_region
      _
    $region65: #{momvfcc_forward.1} parent=1 // pred_fallthru
      _
    // Predicated region
    $region66: #{momvfcc_forward.1} parent=1 // pred_check
      _
    $region67: #{momvfcc_forward.1} parent=1 // pred_check_branch
      %1176 = sbr.rel (0) target = $region69
    $region68: #{momvfcc_forward.1} parent=1 // pred_region
      %1178 = dma.done [#allocation3], 256
    $region69: #{momvfcc_forward.1} parent=1 // pred_fallthru
      _
    // Predicated region
    $region70: #{momvfcc_forward.1} parent=1 // pred_check
      _
    $region71: #{momvfcc_forward.1} parent=1 // pred_check_branch
      %1180 = sbr.rel (0) target = $region73
    $region72: #{momvfcc_forward.1} parent=1 // pred_region
      %1182 = dma.done [#allocation5], 256
    $region73: #{momvfcc_forward.1} parent=1 // pred_fallthru
      _
    // Predicated region
    $region74: #{momvfcc_forward.1} parent=1 // pred_check
      _
    $region75: #{momvfcc_forward.1} parent=1 // pred_check_branch
      %1184 = sbr.rel (0) target = $region77
    $region76: #{momvfcc_forward.1} parent=1 // pred_region
      %1186 = dma.done [#allocation5], 256
    $region77: #{momvfcc_forward.1} parent=1 // pred_fallthru
      _
    // Predicated region
    $region78: #{momvfcc_forward.1} parent=1 // pred_check
      _
    $region79: #{momvfcc_forward.1} parent=1 // pred_check_branch
      %1188 = sbr.rel (0) target = $region81
    $region80: #{momvfcc_forward.1} parent=1 // pred_region
      %1190 = dma.done [#allocation8], 256
    $region81: #{momvfcc_forward.1} parent=1 // pred_fallthru
      _
    // Predicated region
    $region82: #{momvfcc_forward.1} parent=1 // pred_check
      _
    $region83: #{momvfcc_forward.1} parent=1 // pred_check_branch
      %1192 = sbr.rel (0) target = $region85
    $region84: #{momvfcc_forward.1} parent=1 // pred_region
      %1194 = dma.done [#allocation8], 256
    $region85: #{momvfcc_forward.1} parent=1 // pred_fallthru
      _
    // Predicated region
    $region86: #{momvfcc_forward.1} parent=1 // pred_check
      _
    $region87: #{momvfcc_forward.1} parent=1 // pred_check_branch
      %1196 = sbr.rel (0) target = $region89
    $region88: #{momvfcc_forward.1} parent=1 // pred_region
      _
    $region89: #{momvfcc_forward.1} parent=1 // pred_fallthru
      _
    %1197 = vsyncpa [#allocation3], 1
    %1198 = vsyncpa [#allocation5], 1
    %1199 = vsyncpa [#allocation8], 1

</llo_original>
